<compile_context>
chip_gen: v5e
topology: v5e:2x2
jax: 0.10.0
libtpu: 0.0.40
codegen_flags: <defaults>
</compile_context>

<pallas_src>
import functools

import jax
import jax.numpy as jnp
from jax import lax
from jax.experimental import pallas as pl
from jax.experimental.pallas import tpu as pltpu


# ---------------------------------------------------------------------------
# Spectral normalization glue (matches SN.W_ / power_iteration, 1 sv, 1 iter)
# ---------------------------------------------------------------------------
def spectral_normalize(w, u, eps=1e-12):
    out_ch = w.shape[0]
    W_mat = w.reshape(out_ch, -1)                       # (out, in)
    v = u @ W_mat                                       # (1, in)
    v = v / jnp.maximum(jnp.linalg.norm(v), eps)
    u_new = v @ W_mat.T                                 # (1, out)
    u_new = u_new / jnp.maximum(jnp.linalg.norm(u_new), eps)
    sv = jnp.squeeze((v @ W_mat.T) @ u_new.T)           # scalar sigma
    return w / sv
    # TODO(synk): training-mode in-place update of the u/sv buffers is a side
    # effect of the PyTorch module and is not reproduced here (eval semantics).


# ---------------------------------------------------------------------------
# Pallas kernel: per-batch attention block
# ---------------------------------------------------------------------------
def _attention_kernel(x_ref, w_tpg_ref, w_o_ref, sel_ref, gamma_ref, out_ref,
                      *, C8, C2, HW4):
    x_src = x_ref[0]                                    # (C, HW), source dtype
    x_f32 = x_src.astype(jnp.float32)
    gamma = gamma_ref[0, 0]

    # Fused theta/phi/g 1x1 convs: ONE f32 MXU matmul (2*C8 + C2 rows).
    proj = jnp.dot(w_tpg_ref[...], x_f32,
                   preferred_element_type=jnp.float32)  # (2*C8+C2, HW) f32
    theta = proj[:C8, :]                                # (C8, HW)
    pg = proj[C8:, :]                                   # (C8+C2, HW)

    # 2x2 max pool AFTER projection. The 4 window slots are gathered with a
    # host-precomputed 0/1 selection matmul (grid-invariant, VMEM-resident),
    # then reduced with an elementwise max over 4 contiguous lane chunks.
    # TODO(synk): at production H*W replace the O(C*HW^2) selection matmul
    # with an O(C*HW) strided relayout / reshape-max pool (VMEM scaling).
    gathered = jnp.dot(pg, sel_ref[...],
                       preferred_element_type=jnp.float32)     # (C8+C2, 4*HW4)
    pooled = jnp.maximum(
        jnp.maximum(gathered[:, 0:HW4], gathered[:, HW4:2 * HW4]),
        jnp.maximum(gathered[:, 2 * HW4:3 * HW4], gathered[:, 3 * HW4:4 * HW4]))
    phi_pool = pooled[:C8, :]                           # (C8, HW4)
    g_pool = pooled[C8:, :]                             # (C2, HW4)

    # logits (HW, HW4): spatial-major so the softmax reduces along lanes and the
    # big tensor never needs a large XLU transpose.
    logits = lax.dot_general(theta, phi_pool,
                             dimension_numbers=(((0,), (0,)), ((), ())),
                             preferred_element_type=jnp.float32)

    m = jnp.max(logits, axis=-1, keepdims=True)
    e = jnp.exp(logits - m)
    denom = jnp.sum(e, axis=-1, keepdims=True)
    beta = e * pl.reciprocal(denom, approx=True)        # (HW, HW4) f32

    # Channel-major o_mid: (C2, HW) = g_pool @ beta^T — implied transpose lands
    # on the operands of this matmul, not on the f32 epilogue.
    o_mid = lax.dot_general(g_pool, beta,
                            dimension_numbers=(((1,), (1,)), ((), ())),
                            preferred_element_type=jnp.float32)

    # Output 1x1 conv, channel-major: (C, C2) @ (C2, HW) -> (C, HW).
    o_cm = jnp.dot(w_o_ref[...], o_mid,
                   preferred_element_type=jnp.float32)

    # Residual + store directly in (C, HW) layout — no epilogue transpose.
    out_ref[0] = (gamma * o_cm + x_f32).astype(out_ref.dtype)


# ---------------------------------------------------------------------------
# Wrapper
# ---------------------------------------------------------------------------
def attention_forward(x, params):
    B, C, H, W = x.shape
    HW = H * W
    C8, C2 = C // 8, C // 2
    HW4 = HW // 4
    W2 = W // 2

    w_theta = spectral_normalize(params["w_theta"], params["u_theta"]).reshape(C8, C)
    w_phi = spectral_normalize(params["w_phi"], params["u_phi"]).reshape(C8, C)
    w_g = spectral_normalize(params["w_g"], params["u_g"]).reshape(C2, C)
    w_o = spectral_normalize(params["w_o"], params["u_o"]).reshape(C, C2)

    # Stack theta/phi/g into one weight (single fused projection matmul).
    w_tpg = jnp.concatenate([w_theta, w_phi, w_g], axis=0).astype(jnp.float32)
    w_o = w_o.astype(jnp.float32)                       # (C, C2), untransposed
    gamma = jnp.asarray(params["gamma"], jnp.float32).reshape(1, 1)

    # Host-built 0/1 gather matrix for the 2x2 pool: column j = slot*HW4 + k
    # selects source pixel (2*(k//W2) + slot//2, 2*(k%W2) + slot%2).
    j = jnp.arange(4 * HW4)
    slot = j // HW4
    k = j % HW4
    src = 2 * W * (k // W2) + 2 * (k % W2) + (slot // 2) * W + (slot % 2)
    sel = (jnp.arange(HW)[:, None] == src[None, :]).astype(jnp.float32)  # (HW, HW)

    # (B, C, H, W) -> (B, C, HW) is metadata-only; x streamed once, source dtype.
    x_flat = x.reshape(B, C, HW)
    C_tpg = 2 * C8 + C2

    kernel = functools.partial(_attention_kernel, C8=C8, C2=C2, HW4=HW4)
    # TODO(synk): for large H*W add a query-tile grid axis (per-generation TQ,
    # v7x ~ half of v6e) with an explicit vmem_limit_bytes so logits/beta stay
    # bounded in VMEM; unnecessary at these sizes.
    out = pl.pallas_call(
        kernel,
        out_shape=jax.ShapeDtypeStruct((B, C, HW), x.dtype),
        grid=(B,),
        in_specs=[
            pl.BlockSpec((1, C, HW), lambda b: (b, 0, 0)),
            pl.BlockSpec((C_tpg, C), lambda b: (0, 0)),
            pl.BlockSpec((C, C2), lambda b: (0, 0)),
            pl.BlockSpec((HW, 4 * HW4), lambda b: (0, 0)),   # grid-invariant
            pl.BlockSpec(memory_space=pltpu.MemorySpace.SMEM),
        ],
        out_specs=pl.BlockSpec((1, C, HW), lambda b: (b, 0, 0)),
        compiler_params=pltpu.CompilerParams(
            dimension_semantics=("parallel",)),
    )(x_flat, w_tpg, w_o, sel, gamma)
    return out.reshape(B, C, H, W)


# ---------------------------------------------------------------------------
# Pure-JAX f32 reference (mirrors the PyTorch forward) for sanity checking
# ---------------------------------------------------------------------------
def attention_reference(x, params):
    B, C, H, W = x.shape
    C8, C2 = C // 8, C // 2
    w_theta = spectral_normalize(params["w_theta"], params["u_theta"]).reshape(C8, C)
    w_phi = spectral_normalize(params["w_phi"], params["u_phi"]).reshape(C8, C)
    w_g = spectral_normalize(params["w_g"], params["u_g"]).reshape(C2, C)
    w_o = spectral_normalize(params["w_o"], params["u_o"]).reshape(C, C2)
    gamma = params["gamma"]

    xf = x.reshape(B, C, H * W)
    theta = jnp.einsum("oc,bcn->bon", w_theta, xf)                     # (B,C8,HW)
    phi = jnp.einsum("oc,bcn->bon", w_phi, xf).reshape(B, C8, H, W)
    g = jnp.einsum("oc,bcn->bon", w_g, xf).reshape(B, C2, H, W)

    def pool(t):
        b, c, h, w = t.shape
        return jnp.max(t.reshape(b, c, h // 2, 2, w // 2, 2),
                       axis=(3, 5)).reshape(b, c, -1)

    phi = pool(phi)                                                    # (B,C8,HW/4)
    g = pool(g)                                                        # (B,C2,HW/4)
    logits = jnp.einsum("bcq,bck->bqk", theta, phi)                    # (B,HW,HW/4)
    beta = jax.nn.softmax(logits, axis=-1)
    o_mid = jnp.einsum("bck,bqk->bcq", g, beta)                        # (B,C2,HW)
    o = jnp.einsum("oc,bcq->boq", w_o, o_mid)                          # (B,C,HW)
    return (gamma * o + xf).reshape(B, C, H, W)


if __name__ == "__main__":
    B, ch, H, W = 2, 64, 16, 16
    key = jax.random.PRNGKey(0)
    ks = jax.random.split(key, 9)

    x = jax.random.normal(ks[0], (B, ch, H, W), jnp.float32)
    params = {
        # conv weights: (out_ch, in_ch, 1, 1), deterministic init
        "w_theta": 0.05 * jax.random.normal(ks[1], (ch // 8, ch, 1, 1), jnp.float32),
        "w_phi":   0.05 * jax.random.normal(ks[2], (ch // 8, ch, 1, 1), jnp.float32),
        "w_g":     0.05 * jax.random.normal(ks[3], (ch // 2, ch, 1, 1), jnp.float32),
        "w_o":     0.05 * jax.random.normal(ks[4], (ch, ch // 2, 1, 1), jnp.float32),
        # SN power-iteration buffers u0 ~ randn(1, out_ch)
        "u_theta": jax.random.normal(ks[5], (1, ch // 8), jnp.float32),
        "u_phi":   jax.random.normal(ks[6], (1, ch // 8), jnp.float32),
        "u_g":     jax.random.normal(ks[7], (1, ch // 2), jnp.float32),
        "u_o":     jax.random.normal(ks[8], (1, ch), jnp.float32),
        # gamma initialized to 0.0 as in the module __init__
        "gamma": jnp.array(0.0, jnp.float32),
    }

    # Faithful run (gamma = 0.0, as initialized): output == x exactly.
    out = attention_forward(x, params)
    jax.block_until_ready(out)
    ref = attention_reference(x, params)
    assert jnp.allclose(out, ref, atol=1e-4, rtol=1e-4)

    # Attention-path run (gamma = 1.0). Kernel uses f32 MXU math + approx
    # reciprocal in the softmax -> modest tolerance vs pure f32 reference.
    params_g1 = dict(params, gamma=jnp.array(1.0, jnp.float32))
    out_g1 = attention_forward(x, params_g1)
    jax.block_until_ready(out_g1)
    ref_g1 = attention_reference(x, params_g1)
    assert jnp.allclose(out_g1, ref_g1, atol=2e-2, rtol=2e-2)

    print("KERNEL_OK")
</pallas_src>

<mosaic_0001>
module attributes {stable_mosaic.version = 11 : i64} {
  func.func @_attention_kernel(%arg0: i32, %arg1: memref<1x64x256xf32, #tpu.memory_space<vmem>>, %arg2: memref<48x64xf32, #tpu.memory_space<vmem>>, %arg3: memref<64x32xf32, #tpu.memory_space<vmem>>, %arg4: memref<256x256xf32, #tpu.memory_space<vmem>>, %arg5: memref<1x1xf32, #tpu.memory_space<smem>>, %arg6: memref<1x64x256xf32, #tpu.memory_space<vmem>>) attributes {dimension_semantics = [#tpu.dimension_semantics<parallel>], iteration_bounds = array<i64: 2>, scalar_prefetch = 0 : i64, scratch_operands = 0 : i64, tpu.core_type = #tpu.core_type<tc>, window_params = [{transform_indices = @transform_0, window_bounds = array<i64: 1, 64, 256>}, {pipeline_mode = #tpu.pipeline_mode<synchronous>, transform_indices = @transform_1, window_bounds = array<i64: 48, 64>}, {pipeline_mode = #tpu.pipeline_mode<synchronous>, transform_indices = @transform_2, window_bounds = array<i64: 64, 32>}, {pipeline_mode = #tpu.pipeline_mode<synchronous>, transform_indices = @transform_3, window_bounds = array<i64: 256, 256>}, {transform_indices = @transform_4, window_bounds = array<i64: 1, 1>}, {transform_indices = @transform_5, window_bounds = array<i64: 1, 64, 256>}]} {
    %c0 = arith.constant 0 : index
    %c0_0 = arith.constant 0 : index
    %c0_1 = arith.constant 0 : index
    %0 = vector.load %arg1[%c0, %c0_0, %c0_1] : memref<1x64x256xf32, #tpu.memory_space<vmem>>, vector<1x64x256xf32>
    %1 = vector.shape_cast %0 : vector<1x64x256xf32> to vector<64x256xf32>
    %c0_2 = arith.constant 0 : index
    %c0_3 = arith.constant 0 : index
    %2 = memref.load %arg5[%c0_2, %c0_3] : memref<1x1xf32, #tpu.memory_space<smem>>
    %c0_4 = arith.constant 0 : index
    %c0_5 = arith.constant 0 : index
    %3 = vector.load %arg2[%c0_4, %c0_5] : memref<48x64xf32, #tpu.memory_space<vmem>>, vector<48x64xf32>
    %cst = arith.constant dense<0.000000e+00> : vector<48x256xf32>
    %4 = tpu.matmul %3, %1, %cst {dimension_numbers = #tpu.dot_dimension_numbers<[1], [0], [0], [1], [0, 0, 1, 1], [], []>} : vector<48x64xf32>, vector<64x256xf32>, vector<48x256xf32> -> vector<48x256xf32>
    %5 = vector.extract_strided_slice %4 {offsets = [0, 0], sizes = [8, 256], strides = [1, 1]} : vector<48x256xf32> to vector<8x256xf32>
    %6 = vector.extract_strided_slice %4 {offsets = [8, 0], sizes = [40, 256], strides = [1, 1]} : vector<48x256xf32> to vector<40x256xf32>
    %c0_6 = arith.constant 0 : index
    %c0_7 = arith.constant 0 : index
    %7 = vector.load %arg4[%c0_6, %c0_7] : memref<256x256xf32, #tpu.memory_space<vmem>>, vector<256x256xf32>
    %cst_8 = arith.constant dense<0.000000e+00> : vector<40x256xf32>
    %8 = tpu.matmul %6, %7, %cst_8 {dimension_numbers = #tpu.dot_dimension_numbers<[1], [0], [0], [1], [0, 0, 1, 1], [], []>} : vector<40x256xf32>, vector<256x256xf32>, vector<40x256xf32> -> vector<40x256xf32>
    %9 = vector.extract_strided_slice %8 {offsets = [0, 0], sizes = [40, 64], strides = [1, 1]} : vector<40x256xf32> to vector<40x64xf32>
    %10 = vector.extract_strided_slice %8 {offsets = [0, 64], sizes = [40, 64], strides = [1, 1]} : vector<40x256xf32> to vector<40x64xf32>
    %11 = arith.maximumf %9, %10 : vector<40x64xf32>
    %12 = vector.extract_strided_slice %8 {offsets = [0, 128], sizes = [40, 64], strides = [1, 1]} : vector<40x256xf32> to vector<40x64xf32>
    %13 = vector.extract_strided_slice %8 {offsets = [0, 192], sizes = [40, 64], strides = [1, 1]} : vector<40x256xf32> to vector<40x64xf32>
    %14 = arith.maximumf %12, %13 : vector<40x64xf32>
    %15 = arith.maximumf %11, %14 : vector<40x64xf32>
    %16 = vector.extract_strided_slice %15 {offsets = [0, 0], sizes = [8, 64], strides = [1, 1]} : vector<40x64xf32> to vector<8x64xf32>
    %17 = vector.extract_strided_slice %15 {offsets = [8, 0], sizes = [32, 64], strides = [1, 1]} : vector<40x64xf32> to vector<32x64xf32>
    %cst_9 = arith.constant dense<0.000000e+00> : vector<256x64xf32>
    %18 = tpu.matmul %5, %16, %cst_9 {dimension_numbers = #tpu.dot_dimension_numbers<[0], [0], [1], [1], [0, 1, 1, 1], [], []>} : vector<8x256xf32>, vector<8x64xf32>, vector<256x64xf32> -> vector<256x64xf32>
    %cst_10 = arith.constant dense<0xFF800000> : vector<256xf32>
    %19 = vector.multi_reduction <maximumf>, %18, %cst_10 [1] : vector<256x64xf32> to vector<256xf32>
    %20 = vector.shape_cast %19 : vector<256xf32> to vector<256x1xf32>
    %21 = vector.broadcast %20 : vector<256x1xf32> to vector<256x64xf32>
    %22 = arith.subf %18, %21 : vector<256x64xf32>
    %23 = math.exp %22 : vector<256x64xf32>
    %cst_11 = arith.constant dense<0.000000e+00> : vector<256xf32>
    %24 = vector.multi_reduction <add>, %23, %cst_11 [1] : vector<256x64xf32> to vector<256xf32>
    %25 = vector.shape_cast %24 : vector<256xf32> to vector<256x1xf32>
    %26 = tpu.reciprocal %25 {approx = true} : vector<256x1xf32> -> vector<256x1xf32>
    %27 = vector.broadcast %26 : vector<256x1xf32> to vector<256x64xf32>
    %28 = arith.mulf %23, %27 : vector<256x64xf32>
    %cst_12 = arith.constant dense<0.000000e+00> : vector<32x256xf32>
    %29 = tpu.matmul %17, %28, %cst_12 {dimension_numbers = #tpu.dot_dimension_numbers<[1], [1], [0], [0], [0, 0, 1, 0], [], []>} : vector<32x64xf32>, vector<256x64xf32>, vector<32x256xf32> -> vector<32x256xf32>
    %c0_13 = arith.constant 0 : index
    %c0_14 = arith.constant 0 : index
    %30 = vector.load %arg3[%c0_13, %c0_14] : memref<64x32xf32, #tpu.memory_space<vmem>>, vector<64x32xf32>
    %cst_15 = arith.constant dense<0.000000e+00> : vector<64x256xf32>
    %31 = tpu.matmul %30, %29, %cst_15 {dimension_numbers = #tpu.dot_dimension_numbers<[1], [0], [0], [1], [0, 0, 1, 1], [], []>} : vector<64x32xf32>, vector<32x256xf32>, vector<64x256xf32> -> vector<64x256xf32>
    %32 = vector.broadcast %2 : f32 to vector<64x256xf32>
    %33 = arith.mulf %32, %31 : vector<64x256xf32>
    %34 = arith.addf %33, %1 : vector<64x256xf32>
    %c0_16 = arith.constant 0 : index
    %c0_17 = arith.constant 0 : index
    %c0_18 = arith.constant 0 : index
    %35 = vector.load %arg6[%c0_16, %c0_17, %c0_18] : memref<1x64x256xf32, #tpu.memory_space<vmem>>, vector<1x64x256xf32>
    %36 = vector.shape_cast %35 : vector<1x64x256xf32> to vector<64x256xf32>
    %37 = vector.shape_cast %34 : vector<64x256xf32> to vector<1x64x256xf32>
    tpu.vector_store %arg6[%c0_16, %c0_17, %c0_18], %37 {strides = array<i32>} : memref<1x64x256xf32, #tpu.memory_space<vmem>>, vector<1x64x256xf32>,
    return
  }
  func.func @transform_0(%arg0: i32) -> (i32, i32, i32) {
    %c0_i32 = arith.constant 0 : i32
    %c0_i32_0 = arith.constant 0 : i32
    %c0_i32_1 = arith.constant 0 : i32
    return %arg0, %c0_i32, %c0_i32_0 : i32, i32, i32
  }
  func.func @transform_1(%arg0: i32) -> (i32, i32) {
    %c0_i32 = arith.constant 0 : i32
    %c0_i32_0 = arith.constant 0 : i32
    %c0_i32_1 = arith.constant 0 : i32
    return %c0_i32, %c0_i32_0 : i32, i32
  }
  func.func @transform_2(%arg0: i32) -> (i32, i32) {
    %c0_i32 = arith.constant 0 : i32
    %c0_i32_0 = arith.constant 0 : i32
    %c0_i32_1 = arith.constant 0 : i32
    return %c0_i32, %c0_i32_0 : i32, i32
  }
  func.func @transform_3(%arg0: i32) -> (i32, i32) {
    %c0_i32 = arith.constant 0 : i32
    %c0_i32_0 = arith.constant 0 : i32
    %c0_i32_1 = arith.constant 0 : i32
    return %c0_i32, %c0_i32_0 : i32, i32
  }
  func.func @transform_4(%arg0: i32) -> (i32, i32) {
    %c0_i32 = arith.constant 0 : i32
    %c0_i32_0 = arith.constant 0 : i32
    %c0_i32_1 = arith.constant 0 : i32
    return %c0_i32, %c0_i32_0 : i32, i32
  }
  func.func @transform_5(%arg0: i32) -> (i32, i32, i32) {
    %c0_i32 = arith.constant 0 : i32
    %c0_i32_0 = arith.constant 0 : i32
    %c0_i32_1 = arith.constant 0 : i32
    return %arg0, %c0_i32, %c0_i32_0 : i32, i32, i32
  }
}

</mosaic_0001>

<llo_original>
// kernel: tpu_custom_call.1
$region0: #{tpu_custom_call.1}
  #allocation0 [shape = 'u32[]', space=smem, size = 0x4, offset = 0x4, fixed_abs, tag = 'smem constant byte address 0x4 - core index']
  #allocation1 [shape = 'u32[72,128]{1,0:T(1,128)}', space=vmem, size = 0x9000, scoped, tag = 'internal scratch']
  #allocation2 [shape = 'f32[1,1]{1,0:T(1,128)S(6)}', space=smem, size = 0x200, scoped, tag = 'scoped memory for tpu_custom_call.1']
  %s0 = inlined_call_operand.hbm [shape: f32[2,64,256], index: 0, kind: input, shape index: {}]
  %s1 = inlined_call_operand.vmem [shape: f32[48,64], index: 1, kind: input, shape index: {}]
  %s2 = inlined_call_operand.vmem [shape: f32[64,32], index: 2, kind: input, shape index: {}]
  %s3 = inlined_call_operand.hbm [shape: f32[256,256], index: 3, kind: input, shape index: {}]
  %s4 = inlined_call_operand.<no memory space> [shape: f32[1,1], index: 4, kind: input, shape index: {}]
  %s5 = inlined_call_operand.hbm [shape: f32[2,64,256], index: 5, kind: output, shape index: {}]
  %s6 = sld [smem:[#allocation0]]
  $region61: #{tpu_custom_call.1} parent=0
    _
  %s8 = ssub.s32 1, %s6
  %s9 = scalar_select 0, %s8, %s6
  %10 = sst [smem:[#allocation2]] %s4
  $region1: #{tpu_custom_call.1} parent=0
    #allocation3 [shape = 'u8[131072]{0}', space=vmem, size = 0x20000, scoped, tag = 'input window, operand 0']
    #allocation4 [shape = 's32[2]{0}', space=sflag, size = 0x8, scoped, tag = 'scoped memory for tpu_custom_call.1']
    #allocation5 [shape = 's32[2]{0}', space=sflag, size = 0x8, scoped, tag = 'scoped memory for tpu_custom_call.1']
    #allocation6 [shape = 'u8[262144]{0}', space=vmem, size = 0x40000, scoped, tag = 'input window, operand 3, single buffered']
    #allocation7 [shape = 's32[1]{0}', space=sflag, size = 0x4, scoped, tag = 'scoped memory for tpu_custom_call.1']
    #allocation8 [shape = 'u8[131072]{0}', space=vmem, size = 0x20000, scoped, tag = 'output window, operand 0']
    %11 = vsyncpa [#allocation4], 0
    %s12 = scalar_lea.sflag [#allocation4], 1
    %13 = vsyncpa %s12, 0
    %14 = vsyncpa [#allocation7], 0
    %15 = vsyncpa [#allocation5], 0
    %s16 = scalar_lea.sflag [#allocation5], 1
    %17 = vsyncpa %s16, 0
    loop: start=0, step=1, limit=4
    $region2: #{tpu_custom_call.1} parent=1 // loop_pre_header
      _
    $region3: #{tpu_custom_call.1} parent=1 // loop_header
      %s19 = sphi 0, %s23
      %p20 = scmp.ge.s32.totalorder %s19, 4
      %s29 = sphi 0, %s31
      %s32 = sphi 0, %s29
      %s33 = sphi 0, %s32
      %s49 = sphi 0, %s33
      %s53 = sphi 0, %s53
      %s55 = sphi 0, %s53
      %s56 = sphi 0, %s55
      %s70 = sphi 0, %s56
      %s74 = sphi 0, %s74
      %s76 = sphi 0, %s74
      %s77 = sphi 0, %s76
      %s91 = sphi 0, %s77
      %s95 = sphi 0, %s95
      %s97 = sphi 0, %s95
      %s98 = sphi 0, %s97
      %s112 = sphi 0, %s98
      %s116 = sphi 0, %s116
      %s118 = sphi 0, %s116
      %s119 = sphi 0, %s118
      %s133 = sphi 0, %s119
      %s139 = sphi 0, %s141
      %s142 = sphi 0, %s139
      %s143 = sphi 0, %s142
      %s159 = sphi 0, %s143
    $region4: #{tpu_custom_call.1} parent=1 // loop_header_branch
      %22 = sbr.rel (%p20) target = $region8
    $region5: #{tpu_custom_call.1} parent=1 // loop_body
      %s24 = ssub.s32 %s19, 1
      %s25 = ssub.s32 %s19, 2
      %s26 = sadd.s32 %s19, 1
      %s27 = ssub.s32 %s19, %s26
      %p28 = scmp.eq.s32.totalorder %s27, 0
      %s30 = sadd.s32 %s29, 1
      %s31 = scalar_select %p28, %s29, %s30
      %p34 = pneg %p28
      %p35 = scmp.eq.s32.totalorder %s19, 1
      %p36 = por %p34, %p35
      %p37 = scmp.ne.s32.totalorder %s29, %s32
      %p38 = scmp.eq.s32.totalorder %s19, 0
      %p39 = por %p37, %p38
      %p40 = scmp.ne.s32.totalorder %s29, %s32
      %p41 = scmp.eq.s32.totalorder %s24, 1
      %p42 = por %p40, %p41
      %p43 = scmp.ne.s32.totalorder %s32, %s33
      %p44 = scmp.eq.s32.totalorder %s24, 0
      %p45 = por %p43, %p44
      %p46 = scmp.ne.s32.totalorder %s32, %s33
      %p47 = scmp.eq.s32.totalorder %s25, 1
      %p48 = por %p46, %p47
      %p50 = scmp.ne.s32.totalorder %s33, %s49
      %p51 = scmp.eq.s32.totalorder %s25, 0
      %p52 = por %p50, %p51
      %s54 = sadd.s32 %s53, 1
      %p57 = scmp.eq.s32.totalorder %s19, 1
      %p58 = scmp.ne.s32.totalorder %s53, %s55
      %p59 = scmp.eq.s32.totalorder %s19, 0
      %p60 = por %p58, %p59
      %p61 = scmp.ne.s32.totalorder %s53, %s55
      %p62 = scmp.eq.s32.totalorder %s24, 1
      %p63 = por %p61, %p62
      %p64 = scmp.ne.s32.totalorder %s55, %s56
      %p65 = scmp.eq.s32.totalorder %s24, 0
      %p66 = por %p64, %p65
      %p67 = scmp.ne.s32.totalorder %s55, %s56
      %p68 = scmp.eq.s32.totalorder %s25, 1
      %p69 = por %p67, %p68
      %p71 = scmp.ne.s32.totalorder %s56, %s70
      %p72 = scmp.eq.s32.totalorder %s25, 0
      %p73 = por %p71, %p72
      %s75 = sadd.s32 %s74, 1
      %p78 = scmp.eq.s32.totalorder %s19, 1
      %p79 = scmp.ne.s32.totalorder %s74, %s76
      %p80 = scmp.eq.s32.totalorder %s19, 0
      %p81 = por %p79, %p80
      %p82 = scmp.ne.s32.totalorder %s74, %s76
      %p83 = scmp.eq.s32.totalorder %s24, 1
      %p84 = por %p82, %p83
      %p85 = scmp.ne.s32.totalorder %s76, %s77
      %p86 = scmp.eq.s32.totalorder %s24, 0
      %p87 = por %p85, %p86
      %p88 = scmp.ne.s32.totalorder %s76, %s77
      %p89 = scmp.eq.s32.totalorder %s25, 1
      %p90 = por %p88, %p89
      %p92 = scmp.ne.s32.totalorder %s77, %s91
      %p93 = scmp.eq.s32.totalorder %s25, 0
      %p94 = por %p92, %p93
      %s96 = sadd.s32 %s95, 1
      %p99 = scmp.eq.s32.totalorder %s19, 1
      %p100 = scmp.ne.s32.totalorder %s95, %s97
      %p101 = scmp.eq.s32.totalorder %s19, 0
      %p102 = por %p100, %p101
      %p103 = scmp.ne.s32.totalorder %s95, %s97
      %p104 = scmp.eq.s32.totalorder %s24, 1
      %p105 = por %p103, %p104
      %p106 = scmp.ne.s32.totalorder %s97, %s98
      %p107 = scmp.eq.s32.totalorder %s24, 0
      %p108 = por %p106, %p107
      %p109 = scmp.ne.s32.totalorder %s97, %s98
      %p110 = scmp.eq.s32.totalorder %s25, 1
      %p111 = por %p109, %p110
      %p113 = scmp.ne.s32.totalorder %s98, %s112
      %p114 = scmp.eq.s32.totalorder %s25, 0
      %p115 = por %p113, %p114
      %s117 = sadd.s32 %s116, 1
      %p120 = scmp.eq.s32.totalorder %s19, 1
      %p121 = scmp.ne.s32.totalorder %s116, %s118
      %p122 = scmp.eq.s32.totalorder %s19, 0
      %p123 = por %p121, %p122
      %p124 = scmp.ne.s32.totalorder %s116, %s118
      %p125 = scmp.eq.s32.totalorder %s24, 1
      %p126 = por %p124, %p125
      %p127 = scmp.ne.s32.totalorder %s118, %s119
      %p128 = scmp.eq.s32.totalorder %s24, 0
      %p129 = por %p127, %p128
      %p130 = scmp.ne.s32.totalorder %s118, %s119
      %p131 = scmp.eq.s32.totalorder %s25, 1
      %p132 = por %p130, %p131
      %p134 = scmp.ne.s32.totalorder %s119, %s133
      %p135 = scmp.eq.s32.totalorder %s25, 0
      %p136 = por %p134, %p135
      %s137 = ssub.s32 %s19, %s26
      %p138 = scmp.eq.s32.totalorder %s137, 0
      %s140 = sadd.s32 %s139, 1
      %s141 = scalar_select %p138, %s139, %s140
      %p144 = pneg %p138
      %p145 = scmp.eq.s32.totalorder %s19, 1
      %p146 = por %p144, %p145
      %p147 = scmp.ne.s32.totalorder %s139, %s142
      %p148 = scmp.eq.s32.totalorder %s19, 0
      %p149 = por %p147, %p148
      %p150 = scmp.ne.s32.totalorder %s139, %s142
      %p151 = scmp.eq.s32.totalorder %s24, 1
      %p152 = por %p150, %p151
      %p153 = scmp.ne.s32.totalorder %s142, %s143
      %p154 = scmp.eq.s32.totalorder %s24, 0
      %p155 = por %p153, %p154
      %p156 = scmp.ne.s32.totalorder %s142, %s143
      %p157 = scmp.eq.s32.totalorder %s25, 1
      %p158 = por %p156, %p157
      %p160 = scmp.ne.s32.totalorder %s143, %s159
      %p161 = scmp.eq.s32.totalorder %s25, 0
      %p162 = por %p160, %p161
      %p163 = scmp.le.s32.totalorder 1, %s19
      %p164 = scmp.lt.s32.totalorder %s19, 3
      %p165 = pnand %p163, %p164
      %p166 = pneg %p165
      // Predicated region
      $region9: #{tpu_custom_call.1} parent=5 // pred_check
        _
      $region10: #{tpu_custom_call.1} parent=5 // pred_check_branch
        %168 = sbr.rel (%p165) target = $region12
      $region11: #{tpu_custom_call.1} parent=5 // pred_region
        %s169 = ssub.s32 %s19, 1
        // Predicated region
        $region13: #{tpu_custom_call.1} parent=11 // pred_check
          %p170 = pneg %p66
        $region14: #{tpu_custom_call.1} parent=11 // pred_check_branch
          %172 = sbr.rel (%p170) target = $region16
        $region15: #{tpu_custom_call.1} parent=11 // pred_region
          _
        $region16: #{tpu_custom_call.1} parent=11 // pred_fallthru
          _
        // Predicated region
        $region17: #{tpu_custom_call.1} parent=11 // pred_check
          %p173 = pneg %p87
        $region18: #{tpu_custom_call.1} parent=11 // pred_check_branch
          %175 = sbr.rel (%p173) target = $region20
        $region19: #{tpu_custom_call.1} parent=11 // pred_region
          _
        $region20: #{tpu_custom_call.1} parent=11 // pred_fallthru
          _
        // Predicated region
        $region21: #{tpu_custom_call.1} parent=11 // pred_check
          %p176 = pneg %p108
        $region22: #{tpu_custom_call.1} parent=11 // pred_check_branch
          %178 = sbr.rel (%p176) target = $region24
        $region23: #{tpu_custom_call.1} parent=11 // pred_region
          %180 = vsyncadd [#allocation7], 0
          %s181 = sshll.u32 %s3, 4
          %s182 = int_to_ptr.hbm [resolvable:$true] %s181
          %s183 = sshll.u32 [#allocation6], 4
          %s184 = int_to_ptr.vmem [resolvable:$true] %s183
          %189 = dma.hbm_to_vmem [thread:$0]  %s182, 8192, %s184, [#allocation7], 256, 256, 16
        $region24: #{tpu_custom_call.1} parent=11 // pred_fallthru
          _
        // Predicated region
        $region25: #{tpu_custom_call.1} parent=11 // pred_check
          %p190 = pneg %p129
        $region26: #{tpu_custom_call.1} parent=11 // pred_check_branch
          %192 = sbr.rel (%p190) target = $region28
        $region27: #{tpu_custom_call.1} parent=11 // pred_region
          _
        $region28: #{tpu_custom_call.1} parent=11 // pred_fallthru
          _
      $region12: #{tpu_custom_call.1} parent=5 // pred_fallthru
        _
      %p193 = scmp.lt.s32.totalorder %s19, 2
      // Predicated region
      $region29: #{tpu_custom_call.1} parent=5 // pred_check
        %p194 = pneg %p193
      $region30: #{tpu_custom_call.1} parent=5 // pred_check_branch
        %196 = sbr.rel (%p194) target = $region32
      $region31: #{tpu_custom_call.1} parent=5 // pred_region
        // Predicated region
        $region33: #{tpu_custom_call.1} parent=31 // pred_check
          %p197 = pneg %p39
        $region34: #{tpu_custom_call.1} parent=31 // pred_check_branch
          %199 = sbr.rel (%p197) target = $region36
        $region35: #{tpu_custom_call.1} parent=31 // pred_region
          %s200 = sand.u32 %s29, 1
          %s201 = scalar_lea.sflag [#allocation4], %s200
          %s202 = sand.u32 %s29, 1
          %s203 = smul.addr %s202, 128
          %s204 = scalar_lea.vmem [#allocation3], %s203
          %206 = vsyncadd %s201, 0
          %s207 = smul.addr %s19, 16
          %s208 = smul.addr %s207, 8
          %s209 = scalar_lea.hbm %s0, %s208
          %s210 = sshll.u32 %s209, 4
          %s211 = int_to_ptr.hbm [resolvable:$true] %s210
          %s212 = sshll.u32 %s204, 4
          %s213 = int_to_ptr.vmem [resolvable:$true] %s212
          %218 = dma.hbm_to_vmem [thread:$0]  %s211, 2048, %s213, %s201, 256, 256, 16
        $region36: #{tpu_custom_call.1} parent=31 // pred_fallthru
          _
      $region32: #{tpu_custom_call.1} parent=5 // pred_fallthru
        _
      %p219 = scmp.le.s32.totalorder 1, %s19
      %p220 = scmp.lt.s32.totalorder %s19, 3
      %p221 = pnand %p219, %p220
      %p222 = pneg %p221
      // Predicated region
      $region37: #{tpu_custom_call.1} parent=5 // pred_check
        _
      $region38: #{tpu_custom_call.1} parent=5 // pred_check_branch
        %224 = sbr.rel (%p221) target = $region40
      $region39: #{tpu_custom_call.1} parent=5 // pred_region
        %s225 = ssub.s32 %s19, 1
        %s226 = sand.u32 %s32, 1
        %s227 = scalar_lea.sflag [#allocation4], %s226
        %s228 = sand.u32 %s32, 1
        %s229 = smul.addr %s228, 128
        %s230 = scalar_lea.vmem [#allocation3], %s229
        // Predicated region
        $region41: #{tpu_custom_call.1} parent=39 // pred_check
          %p231 = pneg %p45
        $region42: #{tpu_custom_call.1} parent=39 // pred_check_branch
          %233 = sbr.rel (%p231) target = $region44
        $region43: #{tpu_custom_call.1} parent=39 // pred_region
          %235 = dma.done %s227, 2048
        $region44: #{tpu_custom_call.1} parent=39 // pred_fallthru
          _
        // Predicated region
        $region45: #{tpu_custom_call.1} parent=39 // pred_check
          %p236 = pneg %p108
        $region46: #{tpu_custom_call.1} parent=39 // pred_check_branch
          %238 = sbr.rel (%p236) target = $region48
        $region47: #{tpu_custom_call.1} parent=39 // pred_region
          %240 = dma.done [#allocation7], 8192
        $region48: #{tpu_custom_call.1} parent=39 // pred_fallthru
          _
        %s241 = sand.u32 %s32, 1
        %s242 = scalar_lea.sflag [#allocation4], %s241
        %s243 = sand.u32 %s32, 1
        %s244 = smul.addr %s243, 128
        %s245 = scalar_lea.vmem [#allocation3], %s244
        %p246 = pneg %p45
        %p247 = pneg %p42
        %p248 = pneg %p66
        %p249 = pneg %p63
        %p250 = pneg %p87
        %p251 = pneg %p84
        %p252 = pneg %p108
        %p253 = pneg %p105
        %p254 = pneg %p129
        %p255 = pneg %p126
        %p256 = pneg %p155
        %p257 = pneg %p152
        %s258 = sand.u32 %s142, 1
        %s259 = scalar_lea.sflag [#allocation5], %s258
        %s260 = sand.u32 %s142, 1
        %s261 = smul.addr %s260, 128
        %s262 = scalar_lea.vmem [#allocation8], %s261
        %v263 = vld [vmem:[%s230] sm:$0xff]
        %v264 = vld [vmem:[%s230 + $0x8] sm:$0xff]
        %v265 = vld [vmem:[%s230 + $0x10] sm:$0xff]
        %v266 = vld [vmem:[%s230 + $0x18] sm:$0xff]
        %v267 = vld [vmem:[%s230 + $0x20] sm:$0xff]
        %v268 = vld [vmem:[%s230 + $0x28] sm:$0xff]
        %v269 = vld [vmem:[%s230 + $0x30] sm:$0xff]
        %v270 = vld [vmem:[%s230 + $0x38] sm:$0xff]
        %v271 = vld [vmem:[%s230 + $0x40] sm:$0xff]
        %v272 = vld [vmem:[%s230 + $0x48] sm:$0xff]
        %v273 = vld [vmem:[%s230 + $0x50] sm:$0xff]
        %v274 = vld [vmem:[%s230 + $0x58] sm:$0xff]
        %v275 = vld [vmem:[%s230 + $0x60] sm:$0xff]
        %v276 = vld [vmem:[%s230 + $0x68] sm:$0xff]
        %v277 = vld [vmem:[%s230 + $0x70] sm:$0xff]
        %v278 = vld [vmem:[%s230 + $0x78] sm:$0xff]
        %s279 = sld [smem:[#allocation2]]
        %v280 = vld [vmem:[%s1] sm:$0xff]
        %v281 = vld [vmem:[%s1 + $0x8] sm:$0xff]
        %v282 = vld [vmem:[%s1 + $0x10] sm:$0xff]
        %v283 = vld [vmem:[%s1 + $0x18] sm:$0xff]
        %v284 = vld [vmem:[%s1 + $0x20] sm:$0xff]
        %v285 = vld [vmem:[%s1 + $0x28] sm:$0xff]
        %vm286 = vcmask 523264
        %v288 = vsel %vm286, %v280, 0
        %v291 = vsel %vm286, %v281, 0
        %v294 = vsel %vm286, %v282, 0
        %v297 = vsel %vm286, %v283, 0
        %v300 = vsel %vm286, %v284, 0
        %v303 = vsel %vm286, %v285, 0
        %305 = vmatpush.msra.mxu0 0.0
        %306 = vmatpush.msra.mxu0 0.0
        %307 = vmatpush.msra.mxu0 0.0
        %308 = vmatpush.msra.mxu0 0.0
        %309 = vmatpush.msra.mxu0 0.0
        %310 = vmatpush.msra.mxu0 0.0
        %311 = vmatpush.msra.mxu0 0.0
        %312 = vmatpush.msra.mxu0 0.0
        %313 = vmatpush.msra.mxu0 %v277
        %314 = vmatpush.msra.mxu0 %v275
        %315 = vmatpush.msra.mxu0 %v273
        %316 = vmatpush.msra.mxu0 %v271
        %317 = vmatpush.msra.mxu0 %v269
        %318 = vmatpush.msra.mxu0 %v267
        %319 = vmatpush.msra.mxu0 %v265
        %320 = vmatpush.msra.mxu0 %v263
        %321 = vmatmul.f32.gmra.mxu0 %v288
        %v322 = vpop.f32.mrf.mxu0
        %v323 = vadd.f32 0.0, %v322
        %324 = vmatmul.f32.gmra.mxu0 %v291
        %v325 = vpop.f32.mrf.mxu0
        %v326 = vadd.f32 0.0, %v325
        %327 = vmatmul.f32.gmra.mxu0 %v294
        %v328 = vpop.f32.mrf.mxu0
        %v329 = vadd.f32 0.0, %v328
        %330 = vmatmul.f32.gmra.mxu0 %v297
        %v331 = vpop.f32.mrf.mxu0
        %v332 = vadd.f32 0.0, %v331
        %333 = vmatmul.f32.gmra.mxu0 %v300
        %v334 = vpop.f32.mrf.mxu0
        %v335 = vadd.f32 0.0, %v334
        %336 = vmatmul.f32.gmra.mxu0 %v303
        %v337 = vpop.f32.mrf.mxu0
        %v338 = vadd.f32 0.0, %v337
        %339 = vdwg.mxu0
        %340 = vmatpush.msra.mxu0 0.0
        %341 = vmatpush.msra.mxu0 0.0
        %342 = vmatpush.msra.mxu0 0.0
        %343 = vmatpush.msra.mxu0 0.0
        %344 = vmatpush.msra.mxu0 0.0
        %345 = vmatpush.msra.mxu0 0.0
        %346 = vmatpush.msra.mxu0 0.0
        %347 = vmatpush.msra.mxu0 0.0
        %348 = vmatpush.msra.mxu0 %v278
        %349 = vmatpush.msra.mxu0 %v276
        %350 = vmatpush.msra.mxu0 %v274
        %351 = vmatpush.msra.mxu0 %v272
        %352 = vmatpush.msra.mxu0 %v270
        %353 = vmatpush.msra.mxu0 %v268
        %354 = vmatpush.msra.mxu0 %v266
        %355 = vmatpush.msra.mxu0 %v264
        %356 = vmatmul.f32.gmra.mxu0 %v288
        %v357 = vpop.f32.mrf.mxu0
        %v358 = vadd.f32 0.0, %v357
        %359 = vmatmul.f32.gmra.mxu0 %v291
        %v360 = vpop.f32.mrf.mxu0
        %v361 = vadd.f32 0.0, %v360
        %362 = vmatmul.f32.gmra.mxu0 %v294
        %v363 = vpop.f32.mrf.mxu0
        %v364 = vadd.f32 0.0, %v363
        %365 = vmatmul.f32.gmra.mxu0 %v297
        %v366 = vpop.f32.mrf.mxu0
        %v367 = vadd.f32 0.0, %v366
        %368 = vmatmul.f32.gmra.mxu0 %v300
        %v369 = vpop.f32.mrf.mxu0
        %v370 = vadd.f32 0.0, %v369
        %371 = vmatmul.f32.gmra.mxu0 %v303
        %v372 = vpop.f32.mrf.mxu0
        %v373 = vadd.f32 0.0, %v372
        %374 = vdwg.mxu0
        %v375 = vld [vmem:[#allocation6] sm:$0xff]
        %v376 = vld [vmem:[#allocation6 + $0x8] sm:$0xff]
        %v377 = vld [vmem:[#allocation6 + $0x10] sm:$0xff]
        %v378 = vld [vmem:[#allocation6 + $0x18] sm:$0xff]
        %v379 = vld [vmem:[#allocation6 + $0x20] sm:$0xff]
        %v380 = vld [vmem:[#allocation6 + $0x28] sm:$0xff]
        %v381 = vld [vmem:[#allocation6 + $0x30] sm:$0xff]
        %v382 = vld [vmem:[#allocation6 + $0x38] sm:$0xff]
        %v383 = vld [vmem:[#allocation6 + $0x40] sm:$0xff]
        %v384 = vld [vmem:[#allocation6 + $0x48] sm:$0xff]
        %v385 = vld [vmem:[#allocation6 + $0x50] sm:$0xff]
        %v386 = vld [vmem:[#allocation6 + $0x58] sm:$0xff]
        %v387 = vld [vmem:[#allocation6 + $0x60] sm:$0xff]
        %v388 = vld [vmem:[#allocation6 + $0x68] sm:$0xff]
        %v389 = vld [vmem:[#allocation6 + $0x70] sm:$0xff]
        %v390 = vld [vmem:[#allocation6 + $0x78] sm:$0xff]
        %v391 = vld [vmem:[#allocation6 + $0x80] sm:$0xff]
        %v392 = vld [vmem:[#allocation6 + $0x88] sm:$0xff]
        %v393 = vld [vmem:[#allocation6 + $0x90] sm:$0xff]
        %v394 = vld [vmem:[#allocation6 + $0x98] sm:$0xff]
        %v395 = vld [vmem:[#allocation6 + $0xa0] sm:$0xff]
        %v396 = vld [vmem:[#allocation6 + $0xa8] sm:$0xff]
        %v397 = vld [vmem:[#allocation6 + $0xb0] sm:$0xff]
        %v398 = vld [vmem:[#allocation6 + $0xb8] sm:$0xff]
        %v399 = vld [vmem:[#allocation6 + $0xc0] sm:$0xff]
        %v400 = vld [vmem:[#allocation6 + $0xc8] sm:$0xff]
        %v401 = vld [vmem:[#allocation6 + $0xd0] sm:$0xff]
        %v402 = vld [vmem:[#allocation6 + $0xd8] sm:$0xff]
        %v403 = vld [vmem:[#allocation6 + $0xe0] sm:$0xff]
        %v404 = vld [vmem:[#allocation6 + $0xe8] sm:$0xff]
        %v405 = vld [vmem:[#allocation6 + $0xf0] sm:$0xff]
        %v406 = vld [vmem:[#allocation6 + $0xf8] sm:$0xff]
        %v407 = vld [vmem:[#allocation6 + $0x100] sm:$0xff]
        %v408 = vld [vmem:[#allocation6 + $0x108] sm:$0xff]
        %v409 = vld [vmem:[#allocation6 + $0x110] sm:$0xff]
        %v410 = vld [vmem:[#allocation6 + $0x118] sm:$0xff]
        %v411 = vld [vmem:[#allocation6 + $0x120] sm:$0xff]
        %v412 = vld [vmem:[#allocation6 + $0x128] sm:$0xff]
        %v413 = vld [vmem:[#allocation6 + $0x130] sm:$0xff]
        %v414 = vld [vmem:[#allocation6 + $0x138] sm:$0xff]
        %v415 = vld [vmem:[#allocation6 + $0x140] sm:$0xff]
        %v416 = vld [vmem:[#allocation6 + $0x148] sm:$0xff]
        %v417 = vld [vmem:[#allocation6 + $0x150] sm:$0xff]
        %v418 = vld [vmem:[#allocation6 + $0x158] sm:$0xff]
        %v419 = vld [vmem:[#allocation6 + $0x160] sm:$0xff]
        %v420 = vld [vmem:[#allocation6 + $0x168] sm:$0xff]
        %v421 = vld [vmem:[#allocation6 + $0x170] sm:$0xff]
        %v422 = vld [vmem:[#allocation6 + $0x178] sm:$0xff]
        %v423 = vld [vmem:[#allocation6 + $0x180] sm:$0xff]
        %v424 = vld [vmem:[#allocation6 + $0x188] sm:$0xff]
        %v425 = vld [vmem:[#allocation6 + $0x190] sm:$0xff]
        %v426 = vld [vmem:[#allocation6 + $0x198] sm:$0xff]
        %v427 = vld [vmem:[#allocation6 + $0x1a0] sm:$0xff]
        %v428 = vld [vmem:[#allocation6 + $0x1a8] sm:$0xff]
        %v429 = vld [vmem:[#allocation6 + $0x1b0] sm:$0xff]
        %v430 = vld [vmem:[#allocation6 + $0x1b8] sm:$0xff]
        %v431 = vld [vmem:[#allocation6 + $0x1c0] sm:$0xff]
        %v432 = vld [vmem:[#allocation6 + $0x1c8] sm:$0xff]
        %v433 = vld [vmem:[#allocation6 + $0x1d0] sm:$0xff]
        %v434 = vld [vmem:[#allocation6 + $0x1d8] sm:$0xff]
        %v435 = vld [vmem:[#allocation6 + $0x1e0] sm:$0xff]
        %v436 = vld [vmem:[#allocation6 + $0x1e8] sm:$0xff]
        %v437 = vld [vmem:[#allocation6 + $0x1f0] sm:$0xff]
        %v438 = vld [vmem:[#allocation6 + $0x1f8] sm:$0xff]
        %439 = vmatpush.msra.mxu0 %v405
        %440 = vmatpush.msra.mxu0 %v403
        %441 = vmatpush.msra.mxu0 %v401
        %442 = vmatpush.msra.mxu0 %v399
        %443 = vmatpush.msra.mxu0 %v397
        %444 = vmatpush.msra.mxu0 %v395
        %445 = vmatpush.msra.mxu0 %v393
        %446 = vmatpush.msra.mxu0 %v391
        %447 = vmatpush.msra.mxu0 %v389
        %448 = vmatpush.msra.mxu0 %v387
        %449 = vmatpush.msra.mxu0 %v385
        %450 = vmatpush.msra.mxu0 %v383
        %451 = vmatpush.msra.mxu0 %v381
        %452 = vmatpush.msra.mxu0 %v379
        %453 = vmatpush.msra.mxu0 %v377
        %454 = vmatpush.msra.mxu0 %v375
        %455 = vmatmul.f32.gmra.mxu0 %v326
        %v456 = vpop.f32.mrf.mxu0
        %v457 = vadd.f32 0.0, %v456
        %458 = vmatmul.f32.gmra.mxu0 %v329
        %v459 = vpop.f32.mrf.mxu0
        %v460 = vadd.f32 0.0, %v459
        %461 = vmatmul.f32.gmra.mxu0 %v332
        %v462 = vpop.f32.mrf.mxu0
        %v463 = vadd.f32 0.0, %v462
        %464 = vmatmul.f32.gmra.mxu0 %v335
        %v465 = vpop.f32.mrf.mxu0
        %v466 = vadd.f32 0.0, %v465
        %467 = vmatmul.f32.gmra.mxu0 %v338
        %v468 = vpop.f32.mrf.mxu0
        %v469 = vadd.f32 0.0, %v468
        %470 = vdwg.mxu0
        %471 = vmatpush.msra.mxu0 %v437
        %472 = vmatpush.msra.mxu0 %v435
        %473 = vmatpush.msra.mxu0 %v433
        %474 = vmatpush.msra.mxu0 %v431
        %475 = vmatpush.msra.mxu0 %v429
        %476 = vmatpush.msra.mxu0 %v427
        %477 = vmatpush.msra.mxu0 %v425
        %478 = vmatpush.msra.mxu0 %v423
        %479 = vmatpush.msra.mxu0 %v421
        %480 = vmatpush.msra.mxu0 %v419
        %481 = vmatpush.msra.mxu0 %v417
        %482 = vmatpush.msra.mxu0 %v415
        %483 = vmatpush.msra.mxu0 %v413
        %484 = vmatpush.msra.mxu0 %v411
        %485 = vmatpush.msra.mxu0 %v409
        %486 = vmatpush.msra.mxu0 %v407
        %487 = vmatmul.f32.gmra.mxu0 %v361
        %v488 = vpop.f32.mrf.mxu0
        %v489 = vadd.f32 %v457, %v488
        %490 = vmatmul.f32.gmra.mxu0 %v364
        %v491 = vpop.f32.mrf.mxu0
        %v492 = vadd.f32 %v460, %v491
        %493 = vmatmul.f32.gmra.mxu0 %v367
        %v494 = vpop.f32.mrf.mxu0
        %v495 = vadd.f32 %v463, %v494
        %496 = vmatmul.f32.gmra.mxu0 %v370
        %v497 = vpop.f32.mrf.mxu0
        %v498 = vadd.f32 %v466, %v497
        %499 = vmatmul.f32.gmra.mxu0 %v373
        %v500 = vpop.f32.mrf.mxu0
        %v501 = vadd.f32 %v469, %v500
        %502 = vdwg.mxu0
        %503 = vmatpush.msra.mxu0 %v406
        %504 = vmatpush.msra.mxu0 %v404
        %505 = vmatpush.msra.mxu0 %v402
        %506 = vmatpush.msra.mxu0 %v400
        %507 = vmatpush.msra.mxu0 %v398
        %508 = vmatpush.msra.mxu0 %v396
        %509 = vmatpush.msra.mxu0 %v394
        %510 = vmatpush.msra.mxu0 %v392
        %511 = vmatpush.msra.mxu0 %v390
        %512 = vmatpush.msra.mxu0 %v388
        %513 = vmatpush.msra.mxu0 %v386
        %514 = vmatpush.msra.mxu0 %v384
        %515 = vmatpush.msra.mxu0 %v382
        %516 = vmatpush.msra.mxu0 %v380
        %517 = vmatpush.msra.mxu0 %v378
        %518 = vmatpush.msra.mxu0 %v376
        %519 = vmatmul.f32.gmra.mxu0 %v326
        %v520 = vpop.f32.mrf.mxu0
        %v521 = vadd.f32 0.0, %v520
        %522 = vmatmul.f32.gmra.mxu0 %v329
        %v523 = vpop.f32.mrf.mxu0
        %v524 = vadd.f32 0.0, %v523
        %525 = vmatmul.f32.gmra.mxu0 %v332
        %v526 = vpop.f32.mrf.mxu0
        %v527 = vadd.f32 0.0, %v526
        %528 = vmatmul.f32.gmra.mxu0 %v335
        %v529 = vpop.f32.mrf.mxu0
        %v530 = vadd.f32 0.0, %v529
        %531 = vmatmul.f32.gmra.mxu0 %v338
        %v532 = vpop.f32.mrf.mxu0
        %v533 = vadd.f32 0.0, %v532
        %534 = vdwg.mxu0
        %535 = vmatpush.msra.mxu0 %v438
        %536 = vmatpush.msra.mxu0 %v436
        %537 = vmatpush.msra.mxu0 %v434
        %538 = vmatpush.msra.mxu0 %v432
        %539 = vmatpush.msra.mxu0 %v430
        %540 = vmatpush.msra.mxu0 %v428
        %541 = vmatpush.msra.mxu0 %v426
        %542 = vmatpush.msra.mxu0 %v424
        %543 = vmatpush.msra.mxu0 %v422
        %544 = vmatpush.msra.mxu0 %v420
        %545 = vmatpush.msra.mxu0 %v418
        %546 = vmatpush.msra.mxu0 %v416
        %547 = vmatpush.msra.mxu0 %v414
        %548 = vmatpush.msra.mxu0 %v412
        %549 = vmatpush.msra.mxu0 %v410
        %550 = vmatpush.msra.mxu0 %v408
        %551 = vmatmul.f32.gmra.mxu0 %v361
        %v552 = vpop.f32.mrf.mxu0
        %v553 = vadd.f32 %v521, %v552
        %554 = vmatmul.f32.gmra.mxu0 %v364
        %v555 = vpop.f32.mrf.mxu0
        %v556 = vadd.f32 %v524, %v555
        %557 = vmatmul.f32.gmra.mxu0 %v367
        %v558 = vpop.f32.mrf.mxu0
        %v559 = vadd.f32 %v527, %v558
        %560 = vmatmul.f32.gmra.mxu0 %v370
        %v561 = vpop.f32.mrf.mxu0
        %v562 = vadd.f32 %v530, %v561
        %563 = vmatmul.f32.gmra.mxu0 %v373
        %v564 = vpop.f32.mrf.mxu0
        %v565 = vadd.f32 %v533, %v564
        %566 = vdwg.mxu0
        %572 = vrot.lane.b32.xlu0 %v489, 64
        %v573 = vpop.permute.xlu0 %572
        %574 = vrot.lane.b32.xlu0 %v492, 64
        %v575 = vpop.permute.xlu0 %574
        %576 = vrot.lane.b32.xlu0 %v495, 64
        %v577 = vpop.permute.xlu0 %576
        %578 = vrot.lane.b32.xlu0 %v498, 64
        %v579 = vpop.permute.xlu0 %578
        %580 = vrot.lane.b32.xlu0 %v501, 64
        %v581 = vpop.permute.xlu0 %580
        %v587 = vmax.f32 %v489, %v573
        %v588 = vmax.f32 %v492, %v575
        %v589 = vmax.f32 %v495, %v577
        %v590 = vmax.f32 %v498, %v579
        %v591 = vmax.f32 %v501, %v581
        %597 = vrot.lane.b32.xlu0 %v553, 64
        %v598 = vpop.permute.xlu0 %597
        %599 = vrot.lane.b32.xlu0 %v556, 64
        %v600 = vpop.permute.xlu0 %599
        %601 = vrot.lane.b32.xlu0 %v559, 64
        %v602 = vpop.permute.xlu0 %601
        %603 = vrot.lane.b32.xlu0 %v562, 64
        %v604 = vpop.permute.xlu0 %603
        %605 = vrot.lane.b32.xlu0 %v565, 64
        %v606 = vpop.permute.xlu0 %605
        %v612 = vmax.f32 %v553, %v598
        %v613 = vmax.f32 %v556, %v600
        %v614 = vmax.f32 %v559, %v602
        %v615 = vmax.f32 %v562, %v604
        %v616 = vmax.f32 %v565, %v606
        %v617 = vmax.f32 %v587, %v612
        %v618 = vmax.f32 %v588, %v613
        %v619 = vmax.f32 %v589, %v614
        %v620 = vmax.f32 %v590, %v615
        %v621 = vmax.f32 %v591, %v616
        %622 = vxpose.xlu0.b32.start [1/16] %v323, 128
        %623 = vxpose.xlu0.b32.cont [2/16] 0.0, 128
        %624 = vxpose.xlu0.b32.cont [3/16] 0.0, 128
        %625 = vxpose.xlu0.b32.cont [4/16] 0.0, 128
        %626 = vxpose.xlu0.b32.cont [5/16] 0.0, 128
        %627 = vxpose.xlu0.b32.cont [6/16] 0.0, 128
        %628 = vxpose.xlu0.b32.cont [7/16] 0.0, 128
        %629 = vxpose.xlu0.b32.cont [8/16] 0.0, 128
        %630 = vxpose.xlu0.b32.cont [9/16] 0.0, 128
        %631 = vxpose.xlu0.b32.cont [10/16] 0.0, 128
        %632 = vxpose.xlu0.b32.cont [11/16] 0.0, 128
        %633 = vxpose.xlu0.b32.cont [12/16] 0.0, 128
        %634 = vxpose.xlu0.b32.cont [13/16] 0.0, 128
        %635 = vxpose.xlu0.b32.cont [14/16] 0.0, 128
        %636 = vxpose.xlu0.b32.cont [15/16] 0.0, 128
        %637 = vxpose.xlu0.b32.end [16/16] 0.0, 128
        %v638 = vpop.trf.xlu0
        %v639 = vpop.trf.xlu0
        %v640 = vpop.trf.xlu0
        %v641 = vpop.trf.xlu0
        %v642 = vpop.trf.xlu0
        %v643 = vpop.trf.xlu0
        %v644 = vpop.trf.xlu0
        %v645 = vpop.trf.xlu0
        %v646 = vpop.trf.xlu0
        %v647 = vpop.trf.xlu0
        %v648 = vpop.trf.xlu0
        %v649 = vpop.trf.xlu0
        %v650 = vpop.trf.xlu0
        %v651 = vpop.trf.xlu0
        %v652 = vpop.trf.xlu0
        %v653 = vpop.trf.xlu0
        %654 = vxpose.xlu0.b32.start [1/16] %v358, 128
        %655 = vxpose.xlu0.b32.cont [2/16] 0.0, 128
        %656 = vxpose.xlu0.b32.cont [3/16] 0.0, 128
        %657 = vxpose.xlu0.b32.cont [4/16] 0.0, 128
        %658 = vxpose.xlu0.b32.cont [5/16] 0.0, 128
        %659 = vxpose.xlu0.b32.cont [6/16] 0.0, 128
        %660 = vxpose.xlu0.b32.cont [7/16] 0.0, 128
        %661 = vxpose.xlu0.b32.cont [8/16] 0.0, 128
        %662 = vxpose.xlu0.b32.cont [9/16] 0.0, 128
        %663 = vxpose.xlu0.b32.cont [10/16] 0.0, 128
        %664 = vxpose.xlu0.b32.cont [11/16] 0.0, 128
        %665 = vxpose.xlu0.b32.cont [12/16] 0.0, 128
        %666 = vxpose.xlu0.b32.cont [13/16] 0.0, 128
        %667 = vxpose.xlu0.b32.cont [14/16] 0.0, 128
        %668 = vxpose.xlu0.b32.cont [15/16] 0.0, 128
        %669 = vxpose.xlu0.b32.end [16/16] 0.0, 128
        %v670 = vpop.trf.xlu0
        %v671 = vpop.trf.xlu0
        %v672 = vpop.trf.xlu0
        %v673 = vpop.trf.xlu0
        %v674 = vpop.trf.xlu0
        %v675 = vpop.trf.xlu0
        %v676 = vpop.trf.xlu0
        %v677 = vpop.trf.xlu0
        %v678 = vpop.trf.xlu0
        %v679 = vpop.trf.xlu0
        %v680 = vpop.trf.xlu0
        %v681 = vpop.trf.xlu0
        %v682 = vpop.trf.xlu0
        %v683 = vpop.trf.xlu0
        %v684 = vpop.trf.xlu0
        %v685 = vpop.trf.xlu0
        %vm686 = vcmask 64512
        %v688 = vsel %vm686, %v638, 0
        %v691 = vsel %vm686, %v639, 0
        %v694 = vsel %vm686, %v640, 0
        %v697 = vsel %vm686, %v641, 0
        %v700 = vsel %vm686, %v642, 0
        %v703 = vsel %vm686, %v643, 0
        %v706 = vsel %vm686, %v644, 0
        %v709 = vsel %vm686, %v645, 0
        %v712 = vsel %vm686, %v646, 0
        %v715 = vsel %vm686, %v647, 0
        %v718 = vsel %vm686, %v648, 0
        %v721 = vsel %vm686, %v649, 0
        %v724 = vsel %vm686, %v650, 0
        %v727 = vsel %vm686, %v651, 0
        %v730 = vsel %vm686, %v652, 0
        %v733 = vsel %vm686, %v653, 0
        %v736 = vsel %vm686, %v670, 0
        %v739 = vsel %vm686, %v671, 0
        %v742 = vsel %vm686, %v672, 0
        %v745 = vsel %vm686, %v673, 0
        %v748 = vsel %vm686, %v674, 0
        %v751 = vsel %vm686, %v675, 0
        %v754 = vsel %vm686, %v676, 0
        %v757 = vsel %vm686, %v677, 0
        %v760 = vsel %vm686, %v678, 0
        %v763 = vsel %vm686, %v679, 0
        %v766 = vsel %vm686, %v680, 0
        %v769 = vsel %vm686, %v681, 0
        %v772 = vsel %vm686, %v682, 0
        %v775 = vsel %vm686, %v683, 0
        %v778 = vsel %vm686, %v684, 0
        %v781 = vsel %vm686, %v685, 0
        %783 = vmatpush.msra.mxu0 0.0
        %784 = vmatpush.msra.mxu0 0.0
        %785 = vmatpush.msra.mxu0 0.0
        %786 = vmatpush.msra.mxu0 0.0
        %787 = vmatpush.msra.mxu0 0.0
        %788 = vmatpush.msra.mxu0 0.0
        %789 = vmatpush.msra.mxu0 0.0
        %790 = vmatpush.msra.mxu0 0.0
        %791 = vmatpush.msra.mxu0 0.0
        %792 = vmatpush.msra.mxu0 0.0
        %793 = vmatpush.msra.mxu0 0.0
        %794 = vmatpush.msra.mxu0 0.0
        %795 = vmatpush.msra.mxu0 0.0
        %796 = vmatpush.msra.mxu0 0.0
        %797 = vmatpush.msra.mxu0 0.0
        %798 = vmatpush.msra.mxu0 %v617
        %799 = vmatmul.f32.gmra.mxu0 %v688
        %v800 = vpop.f32.mrf.mxu0
        %v801 = vadd.f32 0.0, %v800
        %802 = vmatmul.f32.gmra.mxu0 %v691
        %v803 = vpop.f32.mrf.mxu0
        %v804 = vadd.f32 0.0, %v803
        %805 = vmatmul.f32.gmra.mxu0 %v694
        %v806 = vpop.f32.mrf.mxu0
        %v807 = vadd.f32 0.0, %v806
        %808 = vmatmul.f32.gmra.mxu0 %v697
        %v809 = vpop.f32.mrf.mxu0
        %v810 = vadd.f32 0.0, %v809
        %811 = vmatmul.f32.gmra.mxu0 %v700
        %v812 = vpop.f32.mrf.mxu0
        %v813 = vadd.f32 0.0, %v812
        %814 = vmatmul.f32.gmra.mxu0 %v703
        %v815 = vpop.f32.mrf.mxu0
        %v816 = vadd.f32 0.0, %v815
        %817 = vmatmul.f32.gmra.mxu0 %v706
        %v818 = vpop.f32.mrf.mxu0
        %v819 = vadd.f32 0.0, %v818
        %820 = vmatmul.f32.gmra.mxu0 %v709
        %v821 = vpop.f32.mrf.mxu0
        %v822 = vadd.f32 0.0, %v821
        %823 = vmatmul.f32.gmra.mxu0 %v712
        %v824 = vpop.f32.mrf.mxu0
        %v825 = vadd.f32 0.0, %v824
        %826 = vmatmul.f32.gmra.mxu0 %v715
        %v827 = vpop.f32.mrf.mxu0
        %v828 = vadd.f32 0.0, %v827
        %829 = vmatmul.f32.gmra.mxu0 %v718
        %v830 = vpop.f32.mrf.mxu0
        %v831 = vadd.f32 0.0, %v830
        %832 = vmatmul.f32.gmra.mxu0 %v721
        %v833 = vpop.f32.mrf.mxu0
        %v834 = vadd.f32 0.0, %v833
        %835 = vmatmul.f32.gmra.mxu0 %v724
        %v836 = vpop.f32.mrf.mxu0
        %v837 = vadd.f32 0.0, %v836
        %838 = vmatmul.f32.gmra.mxu0 %v727
        %v839 = vpop.f32.mrf.mxu0
        %v840 = vadd.f32 0.0, %v839
        %841 = vmatmul.f32.gmra.mxu0 %v730
        %v842 = vpop.f32.mrf.mxu0
        %v843 = vadd.f32 0.0, %v842
        %844 = vmatmul.f32.gmra.mxu0 %v733
        %v845 = vpop.f32.mrf.mxu0
        %v846 = vadd.f32 0.0, %v845
        %847 = vmatmul.f32.gmra.mxu0 %v736
        %v848 = vpop.f32.mrf.mxu0
        %v849 = vadd.f32 0.0, %v848
        %850 = vmatmul.f32.gmra.mxu0 %v739
        %v851 = vpop.f32.mrf.mxu0
        %v852 = vadd.f32 0.0, %v851
        %853 = vmatmul.f32.gmra.mxu0 %v742
        %v854 = vpop.f32.mrf.mxu0
        %v855 = vadd.f32 0.0, %v854
        %856 = vmatmul.f32.gmra.mxu0 %v745
        %v857 = vpop.f32.mrf.mxu0
        %v858 = vadd.f32 0.0, %v857
        %859 = vmatmul.f32.gmra.mxu0 %v748
        %v860 = vpop.f32.mrf.mxu0
        %v861 = vadd.f32 0.0, %v860
        %862 = vmatmul.f32.gmra.mxu0 %v751
        %v863 = vpop.f32.mrf.mxu0
        %v864 = vadd.f32 0.0, %v863
        %865 = vmatmul.f32.gmra.mxu0 %v754
        %v866 = vpop.f32.mrf.mxu0
        %v867 = vadd.f32 0.0, %v866
        %868 = vmatmul.f32.gmra.mxu0 %v757
        %v869 = vpop.f32.mrf.mxu0
        %v870 = vadd.f32 0.0, %v869
        %871 = vmatmul.f32.gmra.mxu0 %v760
        %v872 = vpop.f32.mrf.mxu0
        %v873 = vadd.f32 0.0, %v872
        %874 = vmatmul.f32.gmra.mxu0 %v763
        %v875 = vpop.f32.mrf.mxu0
        %v876 = vadd.f32 0.0, %v875
        %877 = vmatmul.f32.gmra.mxu0 %v766
        %v878 = vpop.f32.mrf.mxu0
        %v879 = vadd.f32 0.0, %v878
        %880 = vmatmul.f32.gmra.mxu0 %v769
        %v881 = vpop.f32.mrf.mxu0
        %v882 = vadd.f32 0.0, %v881
        %883 = vmatmul.f32.gmra.mxu0 %v772
        %v884 = vpop.f32.mrf.mxu0
        %v885 = vadd.f32 0.0, %v884
        %886 = vmatmul.f32.gmra.mxu0 %v775
        %v887 = vpop.f32.mrf.mxu0
        %v888 = vadd.f32 0.0, %v887
        %889 = vmatmul.f32.gmra.mxu0 %v778
        %v890 = vpop.f32.mrf.mxu0
        %v891 = vadd.f32 0.0, %v890
        %892 = vmatmul.f32.gmra.mxu0 %v781
        %v893 = vpop.f32.mrf.mxu0
        %v894 = vadd.f32 0.0, %v893
        %895 = vdwg.mxu0
        %v896 = vsel %vm286, %v801, -inf
        %897 = vmax.xlane.f32.xlu0 %v896
        %v898 = vpop.xlane.xlu0 %897
        %v899 = vsel %vm286, %v804, -inf
        %900 = vmax.xlane.f32.xlu0 %v899
        %v901 = vpop.xlane.xlu0 %900
        %v902 = vsel %vm286, %v807, -inf
        %903 = vmax.xlane.f32.xlu0 %v902
        %v904 = vpop.xlane.xlu0 %903
        %v905 = vsel %vm286, %v810, -inf
        %906 = vmax.xlane.f32.xlu0 %v905
        %v907 = vpop.xlane.xlu0 %906
        %v908 = vsel %vm286, %v813, -inf
        %909 = vmax.xlane.f32.xlu0 %v908
        %v910 = vpop.xlane.xlu0 %909
        %v911 = vsel %vm286, %v816, -inf
        %912 = vmax.xlane.f32.xlu0 %v911
        %v913 = vpop.xlane.xlu0 %912
        %v914 = vsel %vm286, %v819, -inf
        %915 = vmax.xlane.f32.xlu0 %v914
        %v916 = vpop.xlane.xlu0 %915
        %v917 = vsel %vm286, %v822, -inf
        %918 = vmax.xlane.f32.xlu0 %v917
        %v919 = vpop.xlane.xlu0 %918
        %v920 = vsel %vm286, %v825, -inf
        %921 = vmax.xlane.f32.xlu0 %v920
        %v922 = vpop.xlane.xlu0 %921
        %v923 = vsel %vm286, %v828, -inf
        %924 = vmax.xlane.f32.xlu0 %v923
        %v925 = vpop.xlane.xlu0 %924
        %v926 = vsel %vm286, %v831, -inf
        %927 = vmax.xlane.f32.xlu0 %v926
        %v928 = vpop.xlane.xlu0 %927
        %v929 = vsel %vm286, %v834, -inf
        %930 = vmax.xlane.f32.xlu0 %v929
        %v931 = vpop.xlane.xlu0 %930
        %v932 = vsel %vm286, %v837, -inf
        %933 = vmax.xlane.f32.xlu0 %v932
        %v934 = vpop.xlane.xlu0 %933
        %v935 = vsel %vm286, %v840, -inf
        %936 = vmax.xlane.f32.xlu0 %v935
        %v937 = vpop.xlane.xlu0 %936
        %v938 = vsel %vm286, %v843, -inf
        %939 = vmax.xlane.f32.xlu0 %v938
        %v940 = vpop.xlane.xlu0 %939
        %v941 = vsel %vm286, %v846, -inf
        %942 = vmax.xlane.f32.xlu0 %v941
        %v943 = vpop.xlane.xlu0 %942
        %v944 = vsel %vm286, %v849, -inf
        %945 = vmax.xlane.f32.xlu0 %v944
        %v946 = vpop.xlane.xlu0 %945
        %v947 = vsel %vm286, %v852, -inf
        %948 = vmax.xlane.f32.xlu0 %v947
        %v949 = vpop.xlane.xlu0 %948
        %v950 = vsel %vm286, %v855, -inf
        %951 = vmax.xlane.f32.xlu0 %v950
        %v952 = vpop.xlane.xlu0 %951
        %v953 = vsel %vm286, %v858, -inf
        %954 = vmax.xlane.f32.xlu0 %v953
        %v955 = vpop.xlane.xlu0 %954
        %v956 = vsel %vm286, %v861, -inf
        %957 = vmax.xlane.f32.xlu0 %v956
        %v958 = vpop.xlane.xlu0 %957
        %v959 = vsel %vm286, %v864, -inf
        %960 = vmax.xlane.f32.xlu0 %v959
        %v961 = vpop.xlane.xlu0 %960
        %v962 = vsel %vm286, %v867, -inf
        %963 = vmax.xlane.f32.xlu0 %v962
        %v964 = vpop.xlane.xlu0 %963
        %v965 = vsel %vm286, %v870, -inf
        %966 = vmax.xlane.f32.xlu0 %v965
        %v967 = vpop.xlane.xlu0 %966
        %v968 = vsel %vm286, %v873, -inf
        %969 = vmax.xlane.f32.xlu0 %v968
        %v970 = vpop.xlane.xlu0 %969
        %v971 = vsel %vm286, %v876, -inf
        %972 = vmax.xlane.f32.xlu0 %v971
        %v973 = vpop.xlane.xlu0 %972
        %v974 = vsel %vm286, %v879, -inf
        %975 = vmax.xlane.f32.xlu0 %v974
        %v976 = vpop.xlane.xlu0 %975
        %v977 = vsel %vm286, %v882, -inf
        %978 = vmax.xlane.f32.xlu0 %v977
        %v979 = vpop.xlane.xlu0 %978
        %v980 = vsel %vm286, %v885, -inf
        %981 = vmax.xlane.f32.xlu0 %v980
        %v982 = vpop.xlane.xlu0 %981
        %v983 = vsel %vm286, %v888, -inf
        %984 = vmax.xlane.f32.xlu0 %v983
        %v985 = vpop.xlane.xlu0 %984
        %v986 = vsel %vm286, %v891, -inf
        %987 = vmax.xlane.f32.xlu0 %v986
        %v988 = vpop.xlane.xlu0 %987
        %v989 = vsel %vm286, %v894, -inf
        %990 = vmax.xlane.f32.xlu0 %v989
        %v991 = vpop.xlane.xlu0 %990
        %v992 = vsub.f32 %v801, %v898
        %v993 = vsub.f32 %v804, %v901
        %v994 = vsub.f32 %v807, %v904
        %v995 = vsub.f32 %v810, %v907
        %v996 = vsub.f32 %v813, %v910
        %v997 = vsub.f32 %v816, %v913
        %v998 = vsub.f32 %v819, %v916
        %v999 = vsub.f32 %v822, %v919
        %v1000 = vsub.f32 %v825, %v922
        %v1001 = vsub.f32 %v828, %v925
        %v1002 = vsub.f32 %v831, %v928
        %v1003 = vsub.f32 %v834, %v931
        %v1004 = vsub.f32 %v837, %v934
        %v1005 = vsub.f32 %v840, %v937
        %v1006 = vsub.f32 %v843, %v940
        %v1007 = vsub.f32 %v846, %v943
        %v1008 = vsub.f32 %v849, %v946
        %v1009 = vsub.f32 %v852, %v949
        %v1010 = vsub.f32 %v855, %v952
        %v1011 = vsub.f32 %v858, %v955
        %v1012 = vsub.f32 %v861, %v958
        %v1013 = vsub.f32 %v864, %v961
        %v1014 = vsub.f32 %v867, %v964
        %v1015 = vsub.f32 %v870, %v967
        %v1016 = vsub.f32 %v873, %v970
        %v1017 = vsub.f32 %v876, %v973
        %v1018 = vsub.f32 %v879, %v976
        %v1019 = vsub.f32 %v882, %v979
        %v1020 = vsub.f32 %v885, %v982
        %v1021 = vsub.f32 %v888, %v985
        %v1022 = vsub.f32 %v891, %v988
        %v1023 = vsub.f32 %v894, %v991
        %v1024 = vmul.f32 %v992, 1.442695
        %v1025 = vpow.pop %v1024
        %v1026 = vmul.f32 %v993, 1.442695
        %v1027 = vpow.pop %v1026
        %v1028 = vmul.f32 %v994, 1.442695
        %v1029 = vpow.pop %v1028
        %v1030 = vmul.f32 %v995, 1.442695
        %v1031 = vpow.pop %v1030
        %v1032 = vmul.f32 %v996, 1.442695
        %v1033 = vpow.pop %v1032
        %v1034 = vmul.f32 %v997, 1.442695
        %v1035 = vpow.pop %v1034
        %v1036 = vmul.f32 %v998, 1.442695
        %v1037 = vpow.pop %v1036
        %v1038 = vmul.f32 %v999, 1.442695
        %v1039 = vpow.pop %v1038
        %v1040 = vmul.f32 %v1000, 1.442695
        %v1041 = vpow.pop %v1040
        %v1042 = vmul.f32 %v1001, 1.442695
        %v1043 = vpow.pop %v1042
        %v1044 = vmul.f32 %v1002, 1.442695
        %v1045 = vpow.pop %v1044
        %v1046 = vmul.f32 %v1003, 1.442695
        %v1047 = vpow.pop %v1046
        %v1048 = vmul.f32 %v1004, 1.442695
        %v1049 = vpow.pop %v1048
        %v1050 = vmul.f32 %v1005, 1.442695
        %v1051 = vpow.pop %v1050
        %v1052 = vmul.f32 %v1006, 1.442695
        %v1053 = vpow.pop %v1052
        %v1054 = vmul.f32 %v1007, 1.442695
        %v1055 = vpow.pop %v1054
        %v1056 = vmul.f32 %v1008, 1.442695
        %v1057 = vpow.pop %v1056
        %v1058 = vmul.f32 %v1009, 1.442695
        %v1059 = vpow.pop %v1058
        %v1060 = vmul.f32 %v1010, 1.442695
        %v1061 = vpow.pop %v1060
        %v1062 = vmul.f32 %v1011, 1.442695
        %v1063 = vpow.pop %v1062
        %v1064 = vmul.f32 %v1012, 1.442695
        %v1065 = vpow.pop %v1064
        %v1066 = vmul.f32 %v1013, 1.442695
        %v1067 = vpow.pop %v1066
        %v1068 = vmul.f32 %v1014, 1.442695
        %v1069 = vpow.pop %v1068
        %v1070 = vmul.f32 %v1015, 1.442695
        %v1071 = vpow.pop %v1070
        %v1072 = vmul.f32 %v1016, 1.442695
        %v1073 = vpow.pop %v1072
        %v1074 = vmul.f32 %v1017, 1.442695
        %v1075 = vpow.pop %v1074
        %v1076 = vmul.f32 %v1018, 1.442695
        %v1077 = vpow.pop %v1076
        %v1078 = vmul.f32 %v1019, 1.442695
        %v1079 = vpow.pop %v1078
        %v1080 = vmul.f32 %v1020, 1.442695
        %v1081 = vpow.pop %v1080
        %v1082 = vmul.f32 %v1021, 1.442695
        %v1083 = vpow.pop %v1082
        %v1084 = vmul.f32 %v1022, 1.442695
        %v1085 = vpow.pop %v1084
        %v1086 = vmul.f32 %v1023, 1.442695
        %v1087 = vpow.pop %v1086
        %v1088 = vsel %vm286, %v1025, 0.0
        %1089 = vadd.xlane.f32.xlu0 %v1088
        %v1090 = vpop.xlane.xlu0 %1089
        %v1091 = vsel %vm286, %v1027, 0.0
        %1092 = vadd.xlane.f32.xlu0 %v1091
        %v1093 = vpop.xlane.xlu0 %1092
        %v1094 = vsel %vm286, %v1029, 0.0
        %1095 = vadd.xlane.f32.xlu0 %v1094
        %v1096 = vpop.xlane.xlu0 %1095
        %v1097 = vsel %vm286, %v1031, 0.0
        %1098 = vadd.xlane.f32.xlu0 %v1097
        %v1099 = vpop.xlane.xlu0 %1098
        %v1100 = vsel %vm286, %v1033, 0.0
        %1101 = vadd.xlane.f32.xlu0 %v1100
        %v1102 = vpop.xlane.xlu0 %1101
        %v1103 = vsel %vm286, %v1035, 0.0
        %1104 = vadd.xlane.f32.xlu0 %v1103
        %v1105 = vpop.xlane.xlu0 %1104
        %v1106 = vsel %vm286, %v1037, 0.0
        %1107 = vadd.xlane.f32.xlu0 %v1106
        %v1108 = vpop.xlane.xlu0 %1107
        %v1109 = vsel %vm286, %v1039, 0.0
        %1110 = vadd.xlane.f32.xlu0 %v1109
        %v1111 = vpop.xlane.xlu0 %1110
        %v1112 = vsel %vm286, %v1041, 0.0
        %1113 = vadd.xlane.f32.xlu0 %v1112
        %v1114 = vpop.xlane.xlu0 %1113
        %v1115 = vsel %vm286, %v1043, 0.0
        %1116 = vadd.xlane.f32.xlu0 %v1115
        %v1117 = vpop.xlane.xlu0 %1116
        %v1118 = vsel %vm286, %v1045, 0.0
        %1119 = vadd.xlane.f32.xlu0 %v1118
        %v1120 = vpop.xlane.xlu0 %1119
        %v1121 = vsel %vm286, %v1047, 0.0
        %1122 = vadd.xlane.f32.xlu0 %v1121
        %v1123 = vpop.xlane.xlu0 %1122
        %v1124 = vsel %vm286, %v1049, 0.0
        %1125 = vadd.xlane.f32.xlu0 %v1124
        %v1126 = vpop.xlane.xlu0 %1125
        %v1127 = vsel %vm286, %v1051, 0.0
        %1128 = vadd.xlane.f32.xlu0 %v1127
        %v1129 = vpop.xlane.xlu0 %1128
        %v1130 = vsel %vm286, %v1053, 0.0
        %1131 = vadd.xlane.f32.xlu0 %v1130
        %v1132 = vpop.xlane.xlu0 %1131
        %v1133 = vsel %vm286, %v1055, 0.0
        %1134 = vadd.xlane.f32.xlu0 %v1133
        %v1135 = vpop.xlane.xlu0 %1134
        %v1136 = vsel %vm286, %v1057, 0.0
        %1137 = vadd.xlane.f32.xlu0 %v1136
        %v1138 = vpop.xlane.xlu0 %1137
        %v1139 = vsel %vm286, %v1059, 0.0
        %1140 = vadd.xlane.f32.xlu0 %v1139
        %v1141 = vpop.xlane.xlu0 %1140
        %v1142 = vsel %vm286, %v1061, 0.0
        %1143 = vadd.xlane.f32.xlu0 %v1142
        %v1144 = vpop.xlane.xlu0 %1143
        %v1145 = vsel %vm286, %v1063, 0.0
        %1146 = vadd.xlane.f32.xlu0 %v1145
        %v1147 = vpop.xlane.xlu0 %1146
        %v1148 = vsel %vm286, %v1065, 0.0
        %1149 = vadd.xlane.f32.xlu0 %v1148
        %v1150 = vpop.xlane.xlu0 %1149
        %v1151 = vsel %vm286, %v1067, 0.0
        %1152 = vadd.xlane.f32.xlu0 %v1151
        %v1153 = vpop.xlane.xlu0 %1152
        %v1154 = vsel %vm286, %v1069, 0.0
        %1155 = vadd.xlane.f32.xlu0 %v1154
        %v1156 = vpop.xlane.xlu0 %1155
        %v1157 = vsel %vm286, %v1071, 0.0
        %1158 = vadd.xlane.f32.xlu0 %v1157
        %v1159 = vpop.xlane.xlu0 %1158
        %v1160 = vsel %vm286, %v1073, 0.0
        %1161 = vadd.xlane.f32.xlu0 %v1160
        %v1162 = vpop.xlane.xlu0 %1161
        %v1163 = vsel %vm286, %v1075, 0.0
        %1164 = vadd.xlane.f32.xlu0 %v1163
        %v1165 = vpop.xlane.xlu0 %1164
        %v1166 = vsel %vm286, %v1077, 0.0
        %1167 = vadd.xlane.f32.xlu0 %v1166
        %v1168 = vpop.xlane.xlu0 %1167
        %v1169 = vsel %vm286, %v1079, 0.0
        %1170 = vadd.xlane.f32.xlu0 %v1169
        %v1171 = vpop.xlane.xlu0 %1170
        %v1172 = vsel %vm286, %v1081, 0.0
        %1173 = vadd.xlane.f32.xlu0 %v1172
        %v1174 = vpop.xlane.xlu0 %1173
        %v1175 = vsel %vm286, %v1083, 0.0
        %1176 = vadd.xlane.f32.xlu0 %v1175
        %v1177 = vpop.xlane.xlu0 %1176
        %v1178 = vsel %vm286, %v1085, 0.0
        %1179 = vadd.xlane.f32.xlu0 %v1178
        %v1180 = vpop.xlane.xlu0 %1179
        %v1181 = vsel %vm286, %v1087, 0.0
        %1182 = vadd.xlane.f32.xlu0 %v1181
        %v1183 = vpop.xlane.xlu0 %1182
        %v1184 = vrcp.pop %v1090
        %v1185 = vrcp.pop %v1093
        %v1186 = vrcp.pop %v1096
        %v1187 = vrcp.pop %v1099
        %v1188 = vrcp.pop %v1102
        %v1189 = vrcp.pop %v1105
        %v1190 = vrcp.pop %v1108
        %v1191 = vrcp.pop %v1111
        %v1192 = vrcp.pop %v1114
        %v1193 = vrcp.pop %v1117
        %v1194 = vrcp.pop %v1120
        %v1195 = vrcp.pop %v1123
        %v1196 = vrcp.pop %v1126
        %v1197 = vrcp.pop %v1129
        %v1198 = vrcp.pop %v1132
        %v1199 = vrcp.pop %v1135
        %v1200 = vrcp.pop %v1138
        %v1201 = vrcp.pop %v1141
        %v1202 = vrcp.pop %v1144
        %v1203 = vrcp.pop %v1147
        %v1204 = vrcp.pop %v1150
        %v1205 = vrcp.pop %v1153
        %v1206 = vrcp.pop %v1156
        %v1207 = vrcp.pop %v1159
        %v1208 = vrcp.pop %v1162
        %v1209 = vrcp.pop %v1165
        %v1210 = vrcp.pop %v1168
        %v1211 = vrcp.pop %v1171
        %v1212 = vrcp.pop %v1174
        %v1213 = vrcp.pop %v1177
        %v1214 = vrcp.pop %v1180
        %v1215 = vrcp.pop %v1183
        %v1216 = vmul.f32 %v1025, %v1184
        %v1217 = vmul.f32 %v1027, %v1185
        %v1218 = vmul.f32 %v1029, %v1186
        %v1219 = vmul.f32 %v1031, %v1187
        %v1220 = vmul.f32 %v1033, %v1188
        %v1221 = vmul.f32 %v1035, %v1189
        %v1222 = vmul.f32 %v1037, %v1190
        %v1223 = vmul.f32 %v1039, %v1191
        %v1224 = vmul.f32 %v1041, %v1192
        %v1225 = vmul.f32 %v1043, %v1193
        %v1226 = vmul.f32 %v1045, %v1194
        %v1227 = vmul.f32 %v1047, %v1195
        %v1228 = vmul.f32 %v1049, %v1196
        %v1229 = vmul.f32 %v1051, %v1197
        %v1230 = vmul.f32 %v1053, %v1198
        %v1231 = vmul.f32 %v1055, %v1199
        %v1232 = vmul.f32 %v1057, %v1200
        %v1233 = vmul.f32 %v1059, %v1201
        %v1234 = vmul.f32 %v1061, %v1202
        %v1235 = vmul.f32 %v1063, %v1203
        %v1236 = vmul.f32 %v1065, %v1204
        %v1237 = vmul.f32 %v1067, %v1205
        %v1238 = vmul.f32 %v1069, %v1206
        %v1239 = vmul.f32 %v1071, %v1207
        %v1240 = vmul.f32 %v1073, %v1208
        %v1241 = vmul.f32 %v1075, %v1209
        %v1242 = vmul.f32 %v1077, %v1210
        %v1243 = vmul.f32 %v1079, %v1211
        %v1244 = vmul.f32 %v1081, %v1212
        %v1245 = vmul.f32 %v1083, %v1213
        %v1246 = vmul.f32 %v1085, %v1214
        %v1247 = vmul.f32 %v1087, %v1215
        %v1249 = vsel %vm286, %v618, 0
        %v1252 = vsel %vm286, %v619, 0
        %v1255 = vsel %vm286, %v620, 0
        %v1258 = vsel %vm286, %v621, 0
        %v1261 = vsel %vm286, %v1216, 0
        %v1264 = vsel %vm286, %v1217, 0
        %v1267 = vsel %vm286, %v1218, 0
        %v1270 = vsel %vm286, %v1219, 0
        %v1273 = vsel %vm286, %v1220, 0
        %v1276 = vsel %vm286, %v1221, 0
        %v1279 = vsel %vm286, %v1222, 0
        %v1282 = vsel %vm286, %v1223, 0
        %v1285 = vsel %vm286, %v1224, 0
        %v1288 = vsel %vm286, %v1225, 0
        %v1291 = vsel %vm286, %v1226, 0
        %v1294 = vsel %vm286, %v1227, 0
        %v1297 = vsel %vm286, %v1228, 0
        %v1300 = vsel %vm286, %v1229, 0
        %v1303 = vsel %vm286, %v1230, 0
        %v1306 = vsel %vm286, %v1231, 0
        %v1309 = vsel %vm286, %v1232, 0
        %v1312 = vsel %vm286, %v1233, 0
        %v1315 = vsel %vm286, %v1234, 0
        %v1318 = vsel %vm286, %v1235, 0
        %v1321 = vsel %vm286, %v1236, 0
        %v1324 = vsel %vm286, %v1237, 0
        %v1327 = vsel %vm286, %v1238, 0
        %v1330 = vsel %vm286, %v1239, 0
        %v1333 = vsel %vm286, %v1240, 0
        %v1336 = vsel %vm286, %v1241, 0
        %v1339 = vsel %vm286, %v1242, 0
        %v1342 = vsel %vm286, %v1243, 0
        %v1345 = vsel %vm286, %v1244, 0
        %v1348 = vsel %vm286, %v1245, 0
        %v1351 = vsel %vm286, %v1246, 0
        %v1354 = vsel %vm286, %v1247, 0
        %1356 = vmatpush.xpose.msra.mxu0 %v1306
        %1357 = vmatpush.xpose.msra.mxu0 %v1303
        %1358 = vmatpush.xpose.msra.mxu0 %v1300
        %1359 = vmatpush.xpose.msra.mxu0 %v1297
        %1360 = vmatpush.xpose.msra.mxu0 %v1294
        %1361 = vmatpush.xpose.msra.mxu0 %v1291
        %1362 = vmatpush.xpose.msra.mxu0 %v1288
        %1363 = vmatpush.xpose.msra.mxu0 %v1285
        %1364 = vmatpush.xpose.msra.mxu0 %v1282
        %1365 = vmatpush.xpose.msra.mxu0 %v1279
        %1366 = vmatpush.xpose.msra.mxu0 %v1276
        %1367 = vmatpush.xpose.msra.mxu0 %v1273
        %1368 = vmatpush.xpose.msra.mxu0 %v1270
        %1369 = vmatpush.xpose.msra.mxu0 %v1267
        %1370 = vmatpush.xpose.msra.mxu0 %v1264
        %1371 = vmatpush.xpose.msra.mxu0 %v1261
        %1372 = vmatmul.f32.gmra.mxu0 %v1249
        %v1373 = vpop.f32.mrf.mxu0
        %v1374 = vadd.f32 0.0, %v1373
        %1375 = vmatmul.f32.gmra.mxu0 %v1252
        %v1376 = vpop.f32.mrf.mxu0
        %v1377 = vadd.f32 0.0, %v1376
        %1378 = vmatmul.f32.gmra.mxu0 %v1255
        %v1379 = vpop.f32.mrf.mxu0
        %v1380 = vadd.f32 0.0, %v1379
        %1381 = vmatmul.f32.gmra.mxu0 %v1258
        %v1382 = vpop.f32.mrf.mxu0
        %v1383 = vadd.f32 0.0, %v1382
        %1384 = vdwg.mxu0
        %1385 = vmatpush.xpose.msra.mxu0 %v1354
        %1386 = vmatpush.xpose.msra.mxu0 %v1351
        %1387 = vmatpush.xpose.msra.mxu0 %v1348
        %1388 = vmatpush.xpose.msra.mxu0 %v1345
        %1389 = vmatpush.xpose.msra.mxu0 %v1342
        %1390 = vmatpush.xpose.msra.mxu0 %v1339
        %1391 = vmatpush.xpose.msra.mxu0 %v1336
        %1392 = vmatpush.xpose.msra.mxu0 %v1333
        %1393 = vmatpush.xpose.msra.mxu0 %v1330
        %1394 = vmatpush.xpose.msra.mxu0 %v1327
        %1395 = vmatpush.xpose.msra.mxu0 %v1324
        %1396 = vmatpush.xpose.msra.mxu0 %v1321
        %1397 = vmatpush.xpose.msra.mxu0 %v1318
        %1398 = vmatpush.xpose.msra.mxu0 %v1315
        %1399 = vmatpush.xpose.msra.mxu0 %v1312
        %1400 = vmatpush.xpose.msra.mxu0 %v1309
        %1401 = vmatmul.f32.gmra.mxu0 %v1249
        %v1402 = vpop.f32.mrf.mxu0
        %v1403 = vadd.f32 0.0, %v1402
        %1404 = vmatmul.f32.gmra.mxu0 %v1252
        %v1405 = vpop.f32.mrf.mxu0
        %v1406 = vadd.f32 0.0, %v1405
        %1407 = vmatmul.f32.gmra.mxu0 %v1255
        %v1408 = vpop.f32.mrf.mxu0
        %v1409 = vadd.f32 0.0, %v1408
        %1410 = vmatmul.f32.gmra.mxu0 %v1258
        %v1411 = vpop.f32.mrf.mxu0
        %v1412 = vadd.f32 0.0, %v1411
        %1413 = vdwg.mxu0
        %v1414 = vld [vmem:[%s2] sm:$0xff]
        %v1415 = vld [vmem:[%s2 + $0x8] sm:$0xff]
        %v1416 = vld [vmem:[%s2 + $0x10] sm:$0xff]
        %v1417 = vld [vmem:[%s2 + $0x18] sm:$0xff]
        %v1418 = vld [vmem:[%s2 + $0x20] sm:$0xff]
        %v1419 = vld [vmem:[%s2 + $0x28] sm:$0xff]
        %v1420 = vld [vmem:[%s2 + $0x30] sm:$0xff]
        %v1421 = vld [vmem:[%s2 + $0x38] sm:$0xff]
        %vm1422 = vcmask 261120
        %v1424 = vsel %vm1422, %v1414, 0
        %v1427 = vsel %vm1422, %v1415, 0
        %v1430 = vsel %vm1422, %v1416, 0
        %v1433 = vsel %vm1422, %v1417, 0
        %v1436 = vsel %vm1422, %v1418, 0
        %v1439 = vsel %vm1422, %v1419, 0
        %v1442 = vsel %vm1422, %v1420, 0
        %v1445 = vsel %vm1422, %v1421, 0
        %1447 = vmatpush.msra.mxu0 0.0
        %1448 = vmatpush.msra.mxu0 0.0
        %1449 = vmatpush.msra.mxu0 0.0
        %1450 = vmatpush.msra.mxu0 0.0
        %1451 = vmatpush.msra.mxu0 0.0
        %1452 = vmatpush.msra.mxu0 0.0
        %1453 = vmatpush.msra.mxu0 0.0
        %1454 = vmatpush.msra.mxu0 0.0
        %1455 = vmatpush.msra.mxu0 0.0
        %1456 = vmatpush.msra.mxu0 0.0
        %1457 = vmatpush.msra.mxu0 0.0
        %1458 = vmatpush.msra.mxu0 0.0
        %1459 = vmatpush.msra.mxu0 %v1383
        %1460 = vmatpush.msra.mxu0 %v1380
        %1461 = vmatpush.msra.mxu0 %v1377
        %1462 = vmatpush.msra.mxu0 %v1374
        %1463 = vmatmul.f32.gmra.mxu0 %v1424
        %v1464 = vpop.f32.mrf.mxu0
        %v1465 = vadd.f32 0.0, %v1464
        %1466 = vmatmul.f32.gmra.mxu0 %v1427
        %v1467 = vpop.f32.mrf.mxu0
        %v1468 = vadd.f32 0.0, %v1467
        %1469 = vmatmul.f32.gmra.mxu0 %v1430
        %v1470 = vpop.f32.mrf.mxu0
        %v1471 = vadd.f32 0.0, %v1470
        %1472 = vmatmul.f32.gmra.mxu0 %v1433
        %v1473 = vpop.f32.mrf.mxu0
        %v1474 = vadd.f32 0.0, %v1473
        %1475 = vmatmul.f32.gmra.mxu0 %v1436
        %v1476 = vpop.f32.mrf.mxu0
        %v1477 = vadd.f32 0.0, %v1476
        %1478 = vmatmul.f32.gmra.mxu0 %v1439
        %v1479 = vpop.f32.mrf.mxu0
        %v1480 = vadd.f32 0.0, %v1479
        %1481 = vmatmul.f32.gmra.mxu0 %v1442
        %v1482 = vpop.f32.mrf.mxu0
        %v1483 = vadd.f32 0.0, %v1482
        %1484 = vmatmul.f32.gmra.mxu0 %v1445
        %v1485 = vpop.f32.mrf.mxu0
        %v1486 = vadd.f32 0.0, %v1485
        %1487 = vdwg.mxu0
        %1488 = vmatpush.msra.mxu0 0.0
        %1489 = vmatpush.msra.mxu0 0.0
        %1490 = vmatpush.msra.mxu0 0.0
        %1491 = vmatpush.msra.mxu0 0.0
        %1492 = vmatpush.msra.mxu0 0.0
        %1493 = vmatpush.msra.mxu0 0.0
        %1494 = vmatpush.msra.mxu0 0.0
        %1495 = vmatpush.msra.mxu0 0.0
        %1496 = vmatpush.msra.mxu0 0.0
        %1497 = vmatpush.msra.mxu0 0.0
        %1498 = vmatpush.msra.mxu0 0.0
        %1499 = vmatpush.msra.mxu0 0.0
        %1500 = vmatpush.msra.mxu0 %v1412
        %1501 = vmatpush.msra.mxu0 %v1409
        %1502 = vmatpush.msra.mxu0 %v1406
        %1503 = vmatpush.msra.mxu0 %v1403
        %1504 = vmatmul.f32.gmra.mxu0 %v1424
        %v1505 = vpop.f32.mrf.mxu0
        %v1506 = vadd.f32 0.0, %v1505
        %1507 = vmatmul.f32.gmra.mxu0 %v1427
        %v1508 = vpop.f32.mrf.mxu0
        %v1509 = vadd.f32 0.0, %v1508
        %1510 = vmatmul.f32.gmra.mxu0 %v1430
        %v1511 = vpop.f32.mrf.mxu0
        %v1512 = vadd.f32 0.0, %v1511
        %1513 = vmatmul.f32.gmra.mxu0 %v1433
        %v1514 = vpop.f32.mrf.mxu0
        %v1515 = vadd.f32 0.0, %v1514
        %1516 = vmatmul.f32.gmra.mxu0 %v1436
        %v1517 = vpop.f32.mrf.mxu0
        %v1518 = vadd.f32 0.0, %v1517
        %1519 = vmatmul.f32.gmra.mxu0 %v1439
        %v1520 = vpop.f32.mrf.mxu0
        %v1521 = vadd.f32 0.0, %v1520
        %1522 = vmatmul.f32.gmra.mxu0 %v1442
        %v1523 = vpop.f32.mrf.mxu0
        %v1524 = vadd.f32 0.0, %v1523
        %1525 = vmatmul.f32.gmra.mxu0 %v1445
        %v1526 = vpop.f32.mrf.mxu0
        %v1527 = vadd.f32 0.0, %v1526
        %1528 = vdwg.mxu0
        %v1529 = vstv %s279
        %v1530 = vmul.f32 %v1529, %v1465
        %v1531 = vmul.f32 %v1529, %v1506
        %v1532 = vmul.f32 %v1529, %v1468
        %v1533 = vmul.f32 %v1529, %v1509
        %v1534 = vmul.f32 %v1529, %v1471
        %v1535 = vmul.f32 %v1529, %v1512
        %v1536 = vmul.f32 %v1529, %v1474
        %v1537 = vmul.f32 %v1529, %v1515
        %v1538 = vmul.f32 %v1529, %v1477
        %v1539 = vmul.f32 %v1529, %v1518
        %v1540 = vmul.f32 %v1529, %v1480
        %v1541 = vmul.f32 %v1529, %v1521
        %v1542 = vmul.f32 %v1529, %v1483
        %v1543 = vmul.f32 %v1529, %v1524
        %v1544 = vmul.f32 %v1529, %v1486
        %v1545 = vmul.f32 %v1529, %v1527
        %v1546 = vadd.f32 %v1530, %v263
        %v1547 = vadd.f32 %v1531, %v264
        %v1548 = vadd.f32 %v1532, %v265
        %v1549 = vadd.f32 %v1533, %v266
        %v1550 = vadd.f32 %v1534, %v267
        %v1551 = vadd.f32 %v1535, %v268
        %v1552 = vadd.f32 %v1536, %v269
        %v1553 = vadd.f32 %v1537, %v270
        %v1554 = vadd.f32 %v1538, %v271
        %v1555 = vadd.f32 %v1539, %v272
        %v1556 = vadd.f32 %v1540, %v273
        %v1557 = vadd.f32 %v1541, %v274
        %v1558 = vadd.f32 %v1542, %v275
        %v1559 = vadd.f32 %v1543, %v276
        %v1560 = vadd.f32 %v1544, %v277
        %v1561 = vadd.f32 %v1545, %v278
        %1562 = vst [vmem:[%s262] sm:$0xff] %v1546
        %1563 = vst [vmem:[%s262 + $0x8] sm:$0xff] %v1547
        %1564 = vst [vmem:[%s262 + $0x10] sm:$0xff] %v1548
        %1565 = vst [vmem:[%s262 + $0x18] sm:$0xff] %v1549
        %1566 = vst [vmem:[%s262 + $0x20] sm:$0xff] %v1550
        %1567 = vst [vmem:[%s262 + $0x28] sm:$0xff] %v1551
        %1568 = vst [vmem:[%s262 + $0x30] sm:$0xff] %v1552
        %1569 = vst [vmem:[%s262 + $0x38] sm:$0xff] %v1553
        %1570 = vst [vmem:[%s262 + $0x40] sm:$0xff] %v1554
        %1571 = vst [vmem:[%s262 + $0x48] sm:$0xff] %v1555
        %1572 = vst [vmem:[%s262 + $0x50] sm:$0xff] %v1556
        %1573 = vst [vmem:[%s262 + $0x58] sm:$0xff] %v1557
        %1574 = vst [vmem:[%s262 + $0x60] sm:$0xff] %v1558
        %1575 = vst [vmem:[%s262 + $0x68] sm:$0xff] %v1559
        %1576 = vst [vmem:[%s262 + $0x70] sm:$0xff] %v1560
        %1577 = vst [vmem:[%s262 + $0x78] sm:$0xff] %v1561
        %s1578 = sand.u32 %s142, 1
        %s1579 = scalar_lea.sflag [#allocation5], %s1578
        %s1580 = sand.u32 %s142, 1
        %s1581 = smul.addr %s1580, 128
        %s1582 = scalar_lea.vmem [#allocation8], %s1581
        // Predicated region
        $region49: #{tpu_custom_call.1} parent=39 // pred_check
          %p1583 = pneg %p152
        $region50: #{tpu_custom_call.1} parent=39 // pred_check_branch
          %1585 = sbr.rel (%p1583) target = $region52
        $region51: #{tpu_custom_call.1} parent=39 // pred_region
          %1587 = vsyncadd %s1579, 0
          %s1588 = smul.addr %s24, 16
          %s1589 = smul.addr %s1588, 8
          %s1590 = scalar_lea.hbm %s5, %s1589
          %s1591 = sshll.u32 %s1582, 4
          %s1592 = int_to_ptr.vmem [resolvable:$true] %s1591
          %s1593 = sshll.u32 %s1590, 4
          %s1594 = int_to_ptr.hbm [resolvable:$true] %s1593
          %1599 = dma.vmem_to_hbm [thread:$0]  %s1592, 2048, %s1594, %s1579, 256, 256, 16
        $region52: #{tpu_custom_call.1} parent=39 // pred_fallthru
          _
      $region40: #{tpu_custom_call.1} parent=5 // pred_fallthru
        _
      %p1600 = scmp.le.s32.totalorder 2, %s19
      // Predicated region
      $region53: #{tpu_custom_call.1} parent=5 // pred_check
        %p1601 = pneg %p1600
      $region54: #{tpu_custom_call.1} parent=5 // pred_check_branch
        %1603 = sbr.rel (%p1601) target = $region56
      $region55: #{tpu_custom_call.1} parent=5 // pred_region
        %s1604 = ssub.s32 %s19, 2
        // Predicated region
        $region57: #{tpu_custom_call.1} parent=55 // pred_check
          %p1605 = pneg %p158
        $region58: #{tpu_custom_call.1} parent=55 // pred_check_branch
          %1607 = sbr.rel (%p1605) target = $region60
        $region59: #{tpu_custom_call.1} parent=55 // pred_region
          %s1608 = sand.u32 %s143, 1
          %s1609 = scalar_lea.sflag [#allocation5], %s1608
          %s1610 = sand.u32 %s143, 1
          %s1611 = smul.addr %s1610, 128
          %s1612 = scalar_lea.vmem [#allocation8], %s1611
          %1614 = dma.done %s1609, 2048
        $region60: #{tpu_custom_call.1} parent=55 // pred_fallthru
          _
      $region56: #{tpu_custom_call.1} parent=5 // pred_fallthru
        _
    $region6: #{tpu_custom_call.1} parent=1 // loop_footer
      %s23 = sadd.s32 1, %s19
    $region7: #{tpu_custom_call.1} parent=1 // loop_footer_branch
      %18 = sbr.rel target = $region3
    $region8: #{tpu_custom_call.1} parent=1 // loop_exit
      _
    %1615 = vsyncpa [#allocation4], 1
    %s1616 = scalar_lea.sflag [#allocation4], 1
    %1617 = vsyncpa %s1616, 1
    %1618 = vsyncpa [#allocation7], 1
    %1619 = vsyncpa [#allocation5], 1
    %s1620 = scalar_lea.sflag [#allocation5], 1
    %1621 = vsyncpa %s1620, 1

</llo_original>
